<compile_context>
chip_gen: v7x
topology: tpu7x:2x2x1
jax: 0.10.0
libtpu: 0.0.40
codegen_flags: <defaults>
</compile_context>

<pallas_src>
import jax
import jax.numpy as jnp
from jax import lax
from jax.experimental import pallas as pl
from jax.experimental.pallas import tpu as pltpu


def _round_up(x, m):
    return ((x + m - 1) // m) * m


# -----------------------------------------------------------------------------
# Kernel: one grid step = one tile of T tokens.
# -----------------------------------------------------------------------------
def _hypersphere_embed_kernel(ids_ref, table_ref, out_ref, buf_ref, sems):
    """
    ids_ref   : SMEM  (n_pad,) int32        scalar-prefetched token ids
    table_ref : HBM   (V, E_pad)            memory_space=pl.ANY, rows gathered by DMA
    out_ref   : VMEM  (T, E_pad)            auto-pipelined output block
    buf_ref   : VMEM  (2, T, E_pad)         double-buffered gather scratch
    sems      : DMA semaphores, shape (2,)  one aggregate semaphore per slot
    """
    T = out_ref.shape[0]
    c = pl.program_id(0)                   # core-split axis ("parallel")
    t = pl.program_id(1)                   # token-tile axis ("arbitrary")
    nt = pl.num_programs(1)
    slot = t % 2
    unroll = True if T <= 64 else 8

    def gather_tile(tile_idx, dst_slot):
        base_tok = pl.multiple_of(tile_idx * T, 8)

        def _issue(i, carry):
            row = ids_ref[base_tok + i]
            pltpu.make_async_copy(
                table_ref.at[pl.ds(row, 1)],          # (1, E_pad) row in HBM
                buf_ref.at[dst_slot, pl.ds(i, 1)],    # (1, E_pad) row in VMEM
                sems.at[dst_slot],                    # one sem per slot
            ).start()
            return carry

        lax.fori_loop(0, T, _issue, 0, unroll=unroll)

    # Prime: first step of this core's range gathers its own tile into slot 0.
    @pl.when(t == 0)
    def _():
        gather_tile(c * nt, 0)

    # Prefetch the next tile of this core's range into the other slot while the
    # current tile's DMAs complete / are consumed.
    @pl.when(t + 1 < nt)
    def _():
        gather_tile(c * nt + t + 1, 1 - slot)

    # Single aggregate wait: T row copies (each E_pad*itemsize bytes) were
    # issued against sems[slot]; this descriptor covers exactly T such rows.
    pltpu.make_async_copy(
        buf_ref.at[1 - slot], buf_ref.at[slot], sems.at[slot]
    ).wait()

    # L2-normalize the whole (T, E_pad) tile.
    x = buf_ref[slot]                                  # (T, E_pad), table dtype
    xf = x.astype(jnp.float32)
    sq = jnp.sum(xf * xf, axis=-1, keepdims=True)      # f32 sum of squares
    # 1 / max(||x||, 1e-12) == rsqrt(max(||x||^2, 1e-24)); rsqrt runs on EUP.
    inv = lax.rsqrt(jnp.maximum(sq, 1e-24))
    out_ref[...] = (x * inv.astype(x.dtype)).astype(out_ref.dtype)


# -----------------------------------------------------------------------------
# Wrapper
# -----------------------------------------------------------------------------
def hyperspherical_embedding(input_ids, embedding_table, *, block_tokens=None,
                             core_splits=2):
    """Pallas forward of HypersphericalEmbedding: gather + L2-normalize."""
    V, E = embedding_table.shape
    dtype = embedding_table.dtype
    itemsize = jnp.dtype(dtype).itemsize

    ids_flat = input_ids.reshape(-1).astype(jnp.int32)
    # Clamp so a bad token id can never become an out-of-bounds HBM DMA.
    ids_flat = jnp.clip(ids_flat, 0, V - 1)
    n = ids_flat.shape[0]

    # Lane-dense layout: pad the embedding dim to a multiple of 128 so output
    # stores are unmasked `vst`.  (In production, store the table pre-padded
    # instead of padding it per call.)
    E_pad = _round_up(E, 128)
    table = embedding_table
    if E_pad != E:
        table = jnp.pad(embedding_table, ((0, 0), (0, E_pad - E)))

    # Tokens per grid step, sized by a ~20 MiB VMEM budget:
    #   2*T*E_pad*item gather double-buffer + 2*T*E_pad*item output
    #   double-buffer + ~T*E_pad*4 f32 temporaries.
    if block_tokens is None:
        budget = 20 * 1024 * 1024
        per_tok = 4 * E_pad * itemsize + 4 * E_pad
        T = max(8, min(512, budget // per_tok))
    else:
        T = block_tokens
    T = min(T, _round_up(n, 8))
    T = max(8, (T // 8) * 8)

    # Leading "parallel" axis: on v7x it splits the token range across the two
    # TensorCores; on v5e/v6e it is just an outer loop (harmless).
    n_tiles = pl.cdiv(n, T)
    NC = core_splits if n_tiles >= core_splits else 1
    NT = pl.cdiv(n_tiles, NC)
    n_pad = NC * NT * T
    if n_pad != n:
        ids_flat = jnp.concatenate(
            [ids_flat, jnp.zeros((n_pad - n,), jnp.int32)]
        )

    # Explicit scoped-VMEM limit (v5e default is only 16 MiB; v7x physical 64).
    vmem_need = 4 * T * E_pad * itemsize + 4 * T * E_pad
    vmem_limit = int(min(max(int(vmem_need * 1.25) + (2 << 20), 16 << 20),
                         48 << 20))

    cost = pl.CostEstimate(
        flops=3 * n * E_pad,
        transcendentals=n,
        bytes_accessed=2 * n * E_pad * itemsize + n * 4,
    )

    out = pl.pallas_call(
        _hypersphere_embed_kernel,
        out_shape=jax.ShapeDtypeStruct((n_pad, E_pad), dtype),
        grid_spec=pltpu.PrefetchScalarGridSpec(
            num_scalar_prefetch=1,                         # ids -> SMEM
            grid=(NC, NT),
            in_specs=[pl.BlockSpec(memory_space=pl.ANY)],  # table stays in HBM
            out_specs=pl.BlockSpec(
                (T, E_pad), lambda c, t, ids, _nt=NT: (c * _nt + t, 0)),
            scratch_shapes=[
                pltpu.VMEM((2, T, E_pad), dtype),          # gather double-buffer
                pltpu.SemaphoreType.DMA((2,)),             # one sem per slot
            ],
        ),
        compiler_params=pltpu.CompilerParams(
            dimension_semantics=("parallel", "arbitrary"),
            vmem_limit_bytes=vmem_limit,
        ),
        cost_estimate=cost,
    )(ids_flat, table)

    return out[:n, :E].reshape(input_ids.shape + (E,))


# -----------------------------------------------------------------------------
# Parameter init (matches HypersphericalEmbedding.__init__) + pure-JAX reference.
# -----------------------------------------------------------------------------
def init_embedding(key, vocab_size, embed_dim, padding_idx=None):
    emb = jax.random.normal(key, (vocab_size, embed_dim), jnp.float32)
    emb = emb / jnp.maximum(jnp.linalg.norm(emb, axis=1, keepdims=True), 1e-12)
    if padding_idx is not None:
        emb = emb.at[padding_idx].set(0.0)
    return emb


def reference_forward(input_ids, embedding_table):
    emb = embedding_table[input_ids]
    norm = jnp.linalg.norm(emb, axis=-1, keepdims=True)
    return emb / jnp.maximum(norm, 1e-12)


if __name__ == "__main__":
    VOCAB, EMBED = 100, 32
    B, S = 2, 8
    PAD = 0

    key = jax.random.PRNGKey(0)
    k_emb, k_ids = jax.random.split(key)
    table = init_embedding(k_emb, VOCAB, EMBED, padding_idx=PAD)
    input_ids = jax.random.randint(k_ids, (B, S), 0, VOCAB, dtype=jnp.int32)
    input_ids = input_ids.at[0, 0].set(PAD)  # exercise the zeroed padding row

    out = hyperspherical_embedding(input_ids, table)
    out = jax.block_until_ready(out)

    ref = reference_forward(input_ids, table)
    assert out.shape == (B, S, EMBED)
    err = float(jnp.max(jnp.abs(out - ref)))
    assert jnp.allclose(out, ref, atol=1e-5, rtol=1e-5), f"max abs err {err}"
    print("KERNEL_OK")
</pallas_src>

<mosaic_0001>
module attributes {stable_mosaic.version = 11 : i64} {
  func.func @_hypersphere_embed_kernel(%arg0: i32, %arg1: i32, %arg2: memref<16xi32, #tpu.memory_space<smem>>, %arg3: memref<100x128xf32, #tpu.memory_space<any>>, %arg4: memref<16x128xf32, #tpu.memory_space<vmem>>, %arg5: memref<2x16x128xf32, #tpu.memory_space<vmem>>, %arg6: memref<2x!tpu.dma_semaphore, #tpu.memory_space<semaphore_mem>>) attributes {dimension_semantics = [#tpu.dimension_semantics<parallel>, #tpu.dimension_semantics<arbitrary>], iteration_bounds = array<i64: 1, 1>, scalar_prefetch = 1 : i64, scratch_operands = 2 : i64, tpu.core_type = #tpu.core_type<tc>, window_params = [{}, {transform_indices = @transform_1, window_bounds = array<i64: 16, 128>}]} {
    %c2_i32 = arith.constant 2 : i32
    %c0_i32 = arith.constant 0 : i32
    %0 = arith.cmpi eq, %c2_i32, %c0_i32 : i32
    %c1_i32 = arith.constant 1 : i32
    %1 = arith.select %0, %c1_i32, %c2_i32 : i32
    %2 = arith.remsi %arg1, %1 : i32
    %c0_i32_0 = arith.constant 0 : i32
    %3 = arith.cmpi ne, %2, %c0_i32_0 : i32
    %c0_i32_1 = arith.constant 0 : i32
    %4 = arith.cmpi slt, %2, %c0_i32_1 : i32
    %c0_i32_2 = arith.constant 0 : i32
    %5 = arith.cmpi slt, %1, %c0_i32_2 : i32
    %6 = arith.xori %4, %5 : i1
    %7 = arith.andi %6, %3 : i1
    %8 = arith.addi %2, %1 : i32
    %9 = arith.select %7, %8, %2 : i32
    %c0_i32_3 = arith.constant 0 : i32
    %10 = arith.cmpi eq, %arg1, %c0_i32_3 : i32
    %11 = arith.extui %10 : i1 to i32
    %c0_i32_4 = arith.constant 0 : i32
    %12 = arith.cmpi ne, %11, %c0_i32_4 : i32
    scf.if %12 {
      %c1_i32_17 = arith.constant 1 : i32
      %36 = arith.muli %arg0, %c1_i32_17 : i32
      %c16_i32 = arith.constant 16 : i32
      %37 = arith.muli %36, %c16_i32 : i32
      %38 = tpu.assume_multiple %37, 8 : i32
      %c0_i32_18 = arith.constant 0 : i32
      %39 = arith.addi %38, %c0_i32_18 : i32
      %40 = arith.index_cast %39 : i32 to index
      %41 = memref.load %arg2[%40] : memref<16xi32, #tpu.memory_space<smem>>
      %c0_i32_19 = arith.constant 0 : i32
      %c0_i32_20 = arith.constant 0 : i32
      %c0_i32_21 = arith.constant 0 : i32
      %42 = tpu.memref_slice %arg3[%41, %c0_i32_21] : memref<100x128xf32, #tpu.memory_space<any>> -> memref<1x128xf32, #tpu.memory_space<any>>
      %c0_i32_22 = arith.constant 0 : i32
      %43 = tpu.memref_slice %arg5[%c0_i32_19, %c0_i32_18, %c0_i32_22] : memref<2x16x128xf32, #tpu.memory_space<vmem>> -> memref<1x1x128xf32, #tpu.memory_space<vmem>>
      %44 = tpu.memref_squeeze %43 : memref<1x1x128xf32, #tpu.memory_space<vmem>> -> memref<1x128xf32, #tpu.memory_space<vmem>>
      %45 = tpu.memref_slice %arg6[%c0_i32_20] : memref<2x!tpu.dma_semaphore, #tpu.memory_space<semaphore_mem>> -> memref<1x!tpu.dma_semaphore, #tpu.memory_space<semaphore_mem>>
      %46 = tpu.memref_squeeze %45 : memref<1x!tpu.dma_semaphore, #tpu.memory_space<semaphore_mem>> -> memref<!tpu.dma_semaphore, #tpu.memory_space<semaphore_mem>>
      tpu.enqueue_dma source(%42 : memref<1x128xf32, #tpu.memory_space<any>>) target(%44 : memref<1x128xf32, #tpu.memory_space<vmem>>) target_semaphore(%46 : memref<!tpu.dma_semaphore, #tpu.memory_space<semaphore_mem>>)
      %c1_i32_23 = arith.constant 1 : i32
      %47 = arith.addi %38, %c1_i32_23 : i32
      %48 = arith.index_cast %47 : i32 to index
      %49 = memref.load %arg2[%48] : memref<16xi32, #tpu.memory_space<smem>>
      %c0_i32_24 = arith.constant 0 : i32
      %c0_i32_25 = arith.constant 0 : i32
      %c0_i32_26 = arith.constant 0 : i32
      %50 = tpu.memref_slice %arg3[%49, %c0_i32_26] : memref<100x128xf32, #tpu.memory_space<any>> -> memref<1x128xf32, #tpu.memory_space<any>>
      %c0_i32_27 = arith.constant 0 : i32
      %51 = tpu.memref_slice %arg5[%c0_i32_24, %c1_i32_23, %c0_i32_27] : memref<2x16x128xf32, #tpu.memory_space<vmem>> -> memref<1x1x128xf32, #tpu.memory_space<vmem>>
      %52 = tpu.memref_squeeze %51 : memref<1x1x128xf32, #tpu.memory_space<vmem>> -> memref<1x128xf32, #tpu.memory_space<vmem>>
      %53 = tpu.memref_slice %arg6[%c0_i32_25] : memref<2x!tpu.dma_semaphore, #tpu.memory_space<semaphore_mem>> -> memref<1x!tpu.dma_semaphore, #tpu.memory_space<semaphore_mem>>
      %54 = tpu.memref_squeeze %53 : memref<1x!tpu.dma_semaphore, #tpu.memory_space<semaphore_mem>> -> memref<!tpu.dma_semaphore, #tpu.memory_space<semaphore_mem>>
      tpu.enqueue_dma source(%50 : memref<1x128xf32, #tpu.memory_space<any>>) target(%52 : memref<1x128xf32, #tpu.memory_space<vmem>>) target_semaphore(%54 : memref<!tpu.dma_semaphore, #tpu.memory_space<semaphore_mem>>)
      %c2_i32_28 = arith.constant 2 : i32
      %55 = arith.addi %38, %c2_i32_28 : i32
      %56 = arith.index_cast %55 : i32 to index
      %57 = memref.load %arg2[%56] : memref<16xi32, #tpu.memory_space<smem>>
      %c0_i32_29 = arith.constant 0 : i32
      %c0_i32_30 = arith.constant 0 : i32
      %c0_i32_31 = arith.constant 0 : i32
      %58 = tpu.memref_slice %arg3[%57, %c0_i32_31] : memref<100x128xf32, #tpu.memory_space<any>> -> memref<1x128xf32, #tpu.memory_space<any>>
      %c0_i32_32 = arith.constant 0 : i32
      %59 = tpu.memref_slice %arg5[%c0_i32_29, %c2_i32_28, %c0_i32_32] : memref<2x16x128xf32, #tpu.memory_space<vmem>> -> memref<1x1x128xf32, #tpu.memory_space<vmem>>
      %60 = tpu.memref_squeeze %59 : memref<1x1x128xf32, #tpu.memory_space<vmem>> -> memref<1x128xf32, #tpu.memory_space<vmem>>
      %61 = tpu.memref_slice %arg6[%c0_i32_30] : memref<2x!tpu.dma_semaphore, #tpu.memory_space<semaphore_mem>> -> memref<1x!tpu.dma_semaphore, #tpu.memory_space<semaphore_mem>>
      %62 = tpu.memref_squeeze %61 : memref<1x!tpu.dma_semaphore, #tpu.memory_space<semaphore_mem>> -> memref<!tpu.dma_semaphore, #tpu.memory_space<semaphore_mem>>
      tpu.enqueue_dma source(%58 : memref<1x128xf32, #tpu.memory_space<any>>) target(%60 : memref<1x128xf32, #tpu.memory_space<vmem>>) target_semaphore(%62 : memref<!tpu.dma_semaphore, #tpu.memory_space<semaphore_mem>>)
      %c3_i32 = arith.constant 3 : i32
      %63 = arith.addi %38, %c3_i32 : i32
      %64 = arith.index_cast %63 : i32 to index
      %65 = memref.load %arg2[%64] : memref<16xi32, #tpu.memory_space<smem>>
      %c0_i32_33 = arith.constant 0 : i32
      %c0_i32_34 = arith.constant 0 : i32
      %c0_i32_35 = arith.constant 0 : i32
      %66 = tpu.memref_slice %arg3[%65, %c0_i32_35] : memref<100x128xf32, #tpu.memory_space<any>> -> memref<1x128xf32, #tpu.memory_space<any>>
      %c0_i32_36 = arith.constant 0 : i32
      %67 = tpu.memref_slice %arg5[%c0_i32_33, %c3_i32, %c0_i32_36] : memref<2x16x128xf32, #tpu.memory_space<vmem>> -> memref<1x1x128xf32, #tpu.memory_space<vmem>>
      %68 = tpu.memref_squeeze %67 : memref<1x1x128xf32, #tpu.memory_space<vmem>> -> memref<1x128xf32, #tpu.memory_space<vmem>>
      %69 = tpu.memref_slice %arg6[%c0_i32_34] : memref<2x!tpu.dma_semaphore, #tpu.memory_space<semaphore_mem>> -> memref<1x!tpu.dma_semaphore, #tpu.memory_space<semaphore_mem>>
      %70 = tpu.memref_squeeze %69 : memref<1x!tpu.dma_semaphore, #tpu.memory_space<semaphore_mem>> -> memref<!tpu.dma_semaphore, #tpu.memory_space<semaphore_mem>>
      tpu.enqueue_dma source(%66 : memref<1x128xf32, #tpu.memory_space<any>>) target(%68 : memref<1x128xf32, #tpu.memory_space<vmem>>) target_semaphore(%70 : memref<!tpu.dma_semaphore, #tpu.memory_space<semaphore_mem>>)
      %c4_i32 = arith.constant 4 : i32
      %71 = arith.addi %38, %c4_i32 : i32
      %72 = arith.index_cast %71 : i32 to index
      %73 = memref.load %arg2[%72] : memref<16xi32, #tpu.memory_space<smem>>
      %c0_i32_37 = arith.constant 0 : i32
      %c0_i32_38 = arith.constant 0 : i32
      %c0_i32_39 = arith.constant 0 : i32
      %74 = tpu.memref_slice %arg3[%73, %c0_i32_39] : memref<100x128xf32, #tpu.memory_space<any>> -> memref<1x128xf32, #tpu.memory_space<any>>
      %c0_i32_40 = arith.constant 0 : i32
      %75 = tpu.memref_slice %arg5[%c0_i32_37, %c4_i32, %c0_i32_40] : memref<2x16x128xf32, #tpu.memory_space<vmem>> -> memref<1x1x128xf32, #tpu.memory_space<vmem>>
      %76 = tpu.memref_squeeze %75 : memref<1x1x128xf32, #tpu.memory_space<vmem>> -> memref<1x128xf32, #tpu.memory_space<vmem>>
      %77 = tpu.memref_slice %arg6[%c0_i32_38] : memref<2x!tpu.dma_semaphore, #tpu.memory_space<semaphore_mem>> -> memref<1x!tpu.dma_semaphore, #tpu.memory_space<semaphore_mem>>
      %78 = tpu.memref_squeeze %77 : memref<1x!tpu.dma_semaphore, #tpu.memory_space<semaphore_mem>> -> memref<!tpu.dma_semaphore, #tpu.memory_space<semaphore_mem>>
      tpu.enqueue_dma source(%74 : memref<1x128xf32, #tpu.memory_space<any>>) target(%76 : memref<1x128xf32, #tpu.memory_space<vmem>>) target_semaphore(%78 : memref<!tpu.dma_semaphore, #tpu.memory_space<semaphore_mem>>)
      %c5_i32 = arith.constant 5 : i32
      %79 = arith.addi %38, %c5_i32 : i32
      %80 = arith.index_cast %79 : i32 to index
      %81 = memref.load %arg2[%80] : memref<16xi32, #tpu.memory_space<smem>>
      %c0_i32_41 = arith.constant 0 : i32
      %c0_i32_42 = arith.constant 0 : i32
      %c0_i32_43 = arith.constant 0 : i32
      %82 = tpu.memref_slice %arg3[%81, %c0_i32_43] : memref<100x128xf32, #tpu.memory_space<any>> -> memref<1x128xf32, #tpu.memory_space<any>>
      %c0_i32_44 = arith.constant 0 : i32
      %83 = tpu.memref_slice %arg5[%c0_i32_41, %c5_i32, %c0_i32_44] : memref<2x16x128xf32, #tpu.memory_space<vmem>> -> memref<1x1x128xf32, #tpu.memory_space<vmem>>
      %84 = tpu.memref_squeeze %83 : memref<1x1x128xf32, #tpu.memory_space<vmem>> -> memref<1x128xf32, #tpu.memory_space<vmem>>
      %85 = tpu.memref_slice %arg6[%c0_i32_42] : memref<2x!tpu.dma_semaphore, #tpu.memory_space<semaphore_mem>> -> memref<1x!tpu.dma_semaphore, #tpu.memory_space<semaphore_mem>>
      %86 = tpu.memref_squeeze %85 : memref<1x!tpu.dma_semaphore, #tpu.memory_space<semaphore_mem>> -> memref<!tpu.dma_semaphore, #tpu.memory_space<semaphore_mem>>
      tpu.enqueue_dma source(%82 : memref<1x128xf32, #tpu.memory_space<any>>) target(%84 : memref<1x128xf32, #tpu.memory_space<vmem>>) target_semaphore(%86 : memref<!tpu.dma_semaphore, #tpu.memory_space<semaphore_mem>>)
      %c6_i32 = arith.constant 6 : i32
      %87 = arith.addi %38, %c6_i32 : i32
      %88 = arith.index_cast %87 : i32 to index
      %89 = memref.load %arg2[%88] : memref<16xi32, #tpu.memory_space<smem>>
      %c0_i32_45 = arith.constant 0 : i32
      %c0_i32_46 = arith.constant 0 : i32
      %c0_i32_47 = arith.constant 0 : i32
      %90 = tpu.memref_slice %arg3[%89, %c0_i32_47] : memref<100x128xf32, #tpu.memory_space<any>> -> memref<1x128xf32, #tpu.memory_space<any>>
      %c0_i32_48 = arith.constant 0 : i32
      %91 = tpu.memref_slice %arg5[%c0_i32_45, %c6_i32, %c0_i32_48] : memref<2x16x128xf32, #tpu.memory_space<vmem>> -> memref<1x1x128xf32, #tpu.memory_space<vmem>>
      %92 = tpu.memref_squeeze %91 : memref<1x1x128xf32, #tpu.memory_space<vmem>> -> memref<1x128xf32, #tpu.memory_space<vmem>>
      %93 = tpu.memref_slice %arg6[%c0_i32_46] : memref<2x!tpu.dma_semaphore, #tpu.memory_space<semaphore_mem>> -> memref<1x!tpu.dma_semaphore, #tpu.memory_space<semaphore_mem>>
      %94 = tpu.memref_squeeze %93 : memref<1x!tpu.dma_semaphore, #tpu.memory_space<semaphore_mem>> -> memref<!tpu.dma_semaphore, #tpu.memory_space<semaphore_mem>>
      tpu.enqueue_dma source(%90 : memref<1x128xf32, #tpu.memory_space<any>>) target(%92 : memref<1x128xf32, #tpu.memory_space<vmem>>) target_semaphore(%94 : memref<!tpu.dma_semaphore, #tpu.memory_space<semaphore_mem>>)
      %c7_i32 = arith.constant 7 : i32
      %95 = arith.addi %38, %c7_i32 : i32
      %96 = arith.index_cast %95 : i32 to index
      %97 = memref.load %arg2[%96] : memref<16xi32, #tpu.memory_space<smem>>
      %c0_i32_49 = arith.constant 0 : i32
      %c0_i32_50 = arith.constant 0 : i32
      %c0_i32_51 = arith.constant 0 : i32
      %98 = tpu.memref_slice %arg3[%97, %c0_i32_51] : memref<100x128xf32, #tpu.memory_space<any>> -> memref<1x128xf32, #tpu.memory_space<any>>
      %c0_i32_52 = arith.constant 0 : i32
      %99 = tpu.memref_slice %arg5[%c0_i32_49, %c7_i32, %c0_i32_52] : memref<2x16x128xf32, #tpu.memory_space<vmem>> -> memref<1x1x128xf32, #tpu.memory_space<vmem>>
      %100 = tpu.memref_squeeze %99 : memref<1x1x128xf32, #tpu.memory_space<vmem>> -> memref<1x128xf32, #tpu.memory_space<vmem>>
      %101 = tpu.memref_slice %arg6[%c0_i32_50] : memref<2x!tpu.dma_semaphore, #tpu.memory_space<semaphore_mem>> -> memref<1x!tpu.dma_semaphore, #tpu.memory_space<semaphore_mem>>
      %102 = tpu.memref_squeeze %101 : memref<1x!tpu.dma_semaphore, #tpu.memory_space<semaphore_mem>> -> memref<!tpu.dma_semaphore, #tpu.memory_space<semaphore_mem>>
      tpu.enqueue_dma source(%98 : memref<1x128xf32, #tpu.memory_space<any>>) target(%100 : memref<1x128xf32, #tpu.memory_space<vmem>>) target_semaphore(%102 : memref<!tpu.dma_semaphore, #tpu.memory_space<semaphore_mem>>)
      %c8_i32 = arith.constant 8 : i32
      %103 = arith.addi %38, %c8_i32 : i32
      %104 = arith.index_cast %103 : i32 to index
      %105 = memref.load %arg2[%104] : memref<16xi32, #tpu.memory_space<smem>>
      %c0_i32_53 = arith.constant 0 : i32
      %c0_i32_54 = arith.constant 0 : i32
      %c0_i32_55 = arith.constant 0 : i32
      %106 = tpu.memref_slice %arg3[%105, %c0_i32_55] : memref<100x128xf32, #tpu.memory_space<any>> -> memref<1x128xf32, #tpu.memory_space<any>>
      %c0_i32_56 = arith.constant 0 : i32
      %107 = tpu.memref_slice %arg5[%c0_i32_53, %c8_i32, %c0_i32_56] : memref<2x16x128xf32, #tpu.memory_space<vmem>> -> memref<1x1x128xf32, #tpu.memory_space<vmem>>
      %108 = tpu.memref_squeeze %107 : memref<1x1x128xf32, #tpu.memory_space<vmem>> -> memref<1x128xf32, #tpu.memory_space<vmem>>
      %109 = tpu.memref_slice %arg6[%c0_i32_54] : memref<2x!tpu.dma_semaphore, #tpu.memory_space<semaphore_mem>> -> memref<1x!tpu.dma_semaphore, #tpu.memory_space<semaphore_mem>>
      %110 = tpu.memref_squeeze %109 : memref<1x!tpu.dma_semaphore, #tpu.memory_space<semaphore_mem>> -> memref<!tpu.dma_semaphore, #tpu.memory_space<semaphore_mem>>
      tpu.enqueue_dma source(%106 : memref<1x128xf32, #tpu.memory_space<any>>) target(%108 : memref<1x128xf32, #tpu.memory_space<vmem>>) target_semaphore(%110 : memref<!tpu.dma_semaphore, #tpu.memory_space<semaphore_mem>>)
      %c9_i32 = arith.constant 9 : i32
      %111 = arith.addi %38, %c9_i32 : i32
      %112 = arith.index_cast %111 : i32 to index
      %113 = memref.load %arg2[%112] : memref<16xi32, #tpu.memory_space<smem>>
      %c0_i32_57 = arith.constant 0 : i32
      %c0_i32_58 = arith.constant 0 : i32
      %c0_i32_59 = arith.constant 0 : i32
      %114 = tpu.memref_slice %arg3[%113, %c0_i32_59] : memref<100x128xf32, #tpu.memory_space<any>> -> memref<1x128xf32, #tpu.memory_space<any>>
      %c0_i32_60 = arith.constant 0 : i32
      %115 = tpu.memref_slice %arg5[%c0_i32_57, %c9_i32, %c0_i32_60] : memref<2x16x128xf32, #tpu.memory_space<vmem>> -> memref<1x1x128xf32, #tpu.memory_space<vmem>>
      %116 = tpu.memref_squeeze %115 : memref<1x1x128xf32, #tpu.memory_space<vmem>> -> memref<1x128xf32, #tpu.memory_space<vmem>>
      %117 = tpu.memref_slice %arg6[%c0_i32_58] : memref<2x!tpu.dma_semaphore, #tpu.memory_space<semaphore_mem>> -> memref<1x!tpu.dma_semaphore, #tpu.memory_space<semaphore_mem>>
      %118 = tpu.memref_squeeze %117 : memref<1x!tpu.dma_semaphore, #tpu.memory_space<semaphore_mem>> -> memref<!tpu.dma_semaphore, #tpu.memory_space<semaphore_mem>>
      tpu.enqueue_dma source(%114 : memref<1x128xf32, #tpu.memory_space<any>>) target(%116 : memref<1x128xf32, #tpu.memory_space<vmem>>) target_semaphore(%118 : memref<!tpu.dma_semaphore, #tpu.memory_space<semaphore_mem>>)
      %c10_i32 = arith.constant 10 : i32
      %119 = arith.addi %38, %c10_i32 : i32
      %120 = arith.index_cast %119 : i32 to index
      %121 = memref.load %arg2[%120] : memref<16xi32, #tpu.memory_space<smem>>
      %c0_i32_61 = arith.constant 0 : i32
      %c0_i32_62 = arith.constant 0 : i32
      %c0_i32_63 = arith.constant 0 : i32
      %122 = tpu.memref_slice %arg3[%121, %c0_i32_63] : memref<100x128xf32, #tpu.memory_space<any>> -> memref<1x128xf32, #tpu.memory_space<any>>
      %c0_i32_64 = arith.constant 0 : i32
      %123 = tpu.memref_slice %arg5[%c0_i32_61, %c10_i32, %c0_i32_64] : memref<2x16x128xf32, #tpu.memory_space<vmem>> -> memref<1x1x128xf32, #tpu.memory_space<vmem>>
      %124 = tpu.memref_squeeze %123 : memref<1x1x128xf32, #tpu.memory_space<vmem>> -> memref<1x128xf32, #tpu.memory_space<vmem>>
      %125 = tpu.memref_slice %arg6[%c0_i32_62] : memref<2x!tpu.dma_semaphore, #tpu.memory_space<semaphore_mem>> -> memref<1x!tpu.dma_semaphore, #tpu.memory_space<semaphore_mem>>
      %126 = tpu.memref_squeeze %125 : memref<1x!tpu.dma_semaphore, #tpu.memory_space<semaphore_mem>> -> memref<!tpu.dma_semaphore, #tpu.memory_space<semaphore_mem>>
      tpu.enqueue_dma source(%122 : memref<1x128xf32, #tpu.memory_space<any>>) target(%124 : memref<1x128xf32, #tpu.memory_space<vmem>>) target_semaphore(%126 : memref<!tpu.dma_semaphore, #tpu.memory_space<semaphore_mem>>)
      %c11_i32 = arith.constant 11 : i32
      %127 = arith.addi %38, %c11_i32 : i32
      %128 = arith.index_cast %127 : i32 to index
      %129 = memref.load %arg2[%128] : memref<16xi32, #tpu.memory_space<smem>>
      %c0_i32_65 = arith.constant 0 : i32
      %c0_i32_66 = arith.constant 0 : i32
      %c0_i32_67 = arith.constant 0 : i32
      %130 = tpu.memref_slice %arg3[%129, %c0_i32_67] : memref<100x128xf32, #tpu.memory_space<any>> -> memref<1x128xf32, #tpu.memory_space<any>>
      %c0_i32_68 = arith.constant 0 : i32
      %131 = tpu.memref_slice %arg5[%c0_i32_65, %c11_i32, %c0_i32_68] : memref<2x16x128xf32, #tpu.memory_space<vmem>> -> memref<1x1x128xf32, #tpu.memory_space<vmem>>
      %132 = tpu.memref_squeeze %131 : memref<1x1x128xf32, #tpu.memory_space<vmem>> -> memref<1x128xf32, #tpu.memory_space<vmem>>
      %133 = tpu.memref_slice %arg6[%c0_i32_66] : memref<2x!tpu.dma_semaphore, #tpu.memory_space<semaphore_mem>> -> memref<1x!tpu.dma_semaphore, #tpu.memory_space<semaphore_mem>>
      %134 = tpu.memref_squeeze %133 : memref<1x!tpu.dma_semaphore, #tpu.memory_space<semaphore_mem>> -> memref<!tpu.dma_semaphore, #tpu.memory_space<semaphore_mem>>
      tpu.enqueue_dma source(%130 : memref<1x128xf32, #tpu.memory_space<any>>) target(%132 : memref<1x128xf32, #tpu.memory_space<vmem>>) target_semaphore(%134 : memref<!tpu.dma_semaphore, #tpu.memory_space<semaphore_mem>>)
      %c12_i32 = arith.constant 12 : i32
      %135 = arith.addi %38, %c12_i32 : i32
      %136 = arith.index_cast %135 : i32 to index
      %137 = memref.load %arg2[%136] : memref<16xi32, #tpu.memory_space<smem>>
      %c0_i32_69 = arith.constant 0 : i32
      %c0_i32_70 = arith.constant 0 : i32
      %c0_i32_71 = arith.constant 0 : i32
      %138 = tpu.memref_slice %arg3[%137, %c0_i32_71] : memref<100x128xf32, #tpu.memory_space<any>> -> memref<1x128xf32, #tpu.memory_space<any>>
      %c0_i32_72 = arith.constant 0 : i32
      %139 = tpu.memref_slice %arg5[%c0_i32_69, %c12_i32, %c0_i32_72] : memref<2x16x128xf32, #tpu.memory_space<vmem>> -> memref<1x1x128xf32, #tpu.memory_space<vmem>>
      %140 = tpu.memref_squeeze %139 : memref<1x1x128xf32, #tpu.memory_space<vmem>> -> memref<1x128xf32, #tpu.memory_space<vmem>>
      %141 = tpu.memref_slice %arg6[%c0_i32_70] : memref<2x!tpu.dma_semaphore, #tpu.memory_space<semaphore_mem>> -> memref<1x!tpu.dma_semaphore, #tpu.memory_space<semaphore_mem>>
      %142 = tpu.memref_squeeze %141 : memref<1x!tpu.dma_semaphore, #tpu.memory_space<semaphore_mem>> -> memref<!tpu.dma_semaphore, #tpu.memory_space<semaphore_mem>>
      tpu.enqueue_dma source(%138 : memref<1x128xf32, #tpu.memory_space<any>>) target(%140 : memref<1x128xf32, #tpu.memory_space<vmem>>) target_semaphore(%142 : memref<!tpu.dma_semaphore, #tpu.memory_space<semaphore_mem>>)
      %c13_i32 = arith.constant 13 : i32
      %143 = arith.addi %38, %c13_i32 : i32
      %144 = arith.index_cast %143 : i32 to index
      %145 = memref.load %arg2[%144] : memref<16xi32, #tpu.memory_space<smem>>
      %c0_i32_73 = arith.constant 0 : i32
      %c0_i32_74 = arith.constant 0 : i32
      %c0_i32_75 = arith.constant 0 : i32
      %146 = tpu.memref_slice %arg3[%145, %c0_i32_75] : memref<100x128xf32, #tpu.memory_space<any>> -> memref<1x128xf32, #tpu.memory_space<any>>
      %c0_i32_76 = arith.constant 0 : i32
      %147 = tpu.memref_slice %arg5[%c0_i32_73, %c13_i32, %c0_i32_76] : memref<2x16x128xf32, #tpu.memory_space<vmem>> -> memref<1x1x128xf32, #tpu.memory_space<vmem>>
      %148 = tpu.memref_squeeze %147 : memref<1x1x128xf32, #tpu.memory_space<vmem>> -> memref<1x128xf32, #tpu.memory_space<vmem>>
      %149 = tpu.memref_slice %arg6[%c0_i32_74] : memref<2x!tpu.dma_semaphore, #tpu.memory_space<semaphore_mem>> -> memref<1x!tpu.dma_semaphore, #tpu.memory_space<semaphore_mem>>
      %150 = tpu.memref_squeeze %149 : memref<1x!tpu.dma_semaphore, #tpu.memory_space<semaphore_mem>> -> memref<!tpu.dma_semaphore, #tpu.memory_space<semaphore_mem>>
      tpu.enqueue_dma source(%146 : memref<1x128xf32, #tpu.memory_space<any>>) target(%148 : memref<1x128xf32, #tpu.memory_space<vmem>>) target_semaphore(%150 : memref<!tpu.dma_semaphore, #tpu.memory_space<semaphore_mem>>)
      %c14_i32 = arith.constant 14 : i32
      %151 = arith.addi %38, %c14_i32 : i32
      %152 = arith.index_cast %151 : i32 to index
      %153 = memref.load %arg2[%152] : memref<16xi32, #tpu.memory_space<smem>>
      %c0_i32_77 = arith.constant 0 : i32
      %c0_i32_78 = arith.constant 0 : i32
      %c0_i32_79 = arith.constant 0 : i32
      %154 = tpu.memref_slice %arg3[%153, %c0_i32_79] : memref<100x128xf32, #tpu.memory_space<any>> -> memref<1x128xf32, #tpu.memory_space<any>>
      %c0_i32_80 = arith.constant 0 : i32
      %155 = tpu.memref_slice %arg5[%c0_i32_77, %c14_i32, %c0_i32_80] : memref<2x16x128xf32, #tpu.memory_space<vmem>> -> memref<1x1x128xf32, #tpu.memory_space<vmem>>
      %156 = tpu.memref_squeeze %155 : memref<1x1x128xf32, #tpu.memory_space<vmem>> -> memref<1x128xf32, #tpu.memory_space<vmem>>
      %157 = tpu.memref_slice %arg6[%c0_i32_78] : memref<2x!tpu.dma_semaphore, #tpu.memory_space<semaphore_mem>> -> memref<1x!tpu.dma_semaphore, #tpu.memory_space<semaphore_mem>>
      %158 = tpu.memref_squeeze %157 : memref<1x!tpu.dma_semaphore, #tpu.memory_space<semaphore_mem>> -> memref<!tpu.dma_semaphore, #tpu.memory_space<semaphore_mem>>
      tpu.enqueue_dma source(%154 : memref<1x128xf32, #tpu.memory_space<any>>) target(%156 : memref<1x128xf32, #tpu.memory_space<vmem>>) target_semaphore(%158 : memref<!tpu.dma_semaphore, #tpu.memory_space<semaphore_mem>>)
      %c15_i32 = arith.constant 15 : i32
      %159 = arith.addi %38, %c15_i32 : i32
      %160 = arith.index_cast %159 : i32 to index
      %161 = memref.load %arg2[%160] : memref<16xi32, #tpu.memory_space<smem>>
      %c0_i32_81 = arith.constant 0 : i32
      %c0_i32_82 = arith.constant 0 : i32
      %c0_i32_83 = arith.constant 0 : i32
      %162 = tpu.memref_slice %arg3[%161, %c0_i32_83] : memref<100x128xf32, #tpu.memory_space<any>> -> memref<1x128xf32, #tpu.memory_space<any>>
      %c0_i32_84 = arith.constant 0 : i32
      %163 = tpu.memref_slice %arg5[%c0_i32_81, %c15_i32, %c0_i32_84] : memref<2x16x128xf32, #tpu.memory_space<vmem>> -> memref<1x1x128xf32, #tpu.memory_space<vmem>>
      %164 = tpu.memref_squeeze %163 : memref<1x1x128xf32, #tpu.memory_space<vmem>> -> memref<1x128xf32, #tpu.memory_space<vmem>>
      %165 = tpu.memref_slice %arg6[%c0_i32_82] : memref<2x!tpu.dma_semaphore, #tpu.memory_space<semaphore_mem>> -> memref<1x!tpu.dma_semaphore, #tpu.memory_space<semaphore_mem>>
      %166 = tpu.memref_squeeze %165 : memref<1x!tpu.dma_semaphore, #tpu.memory_space<semaphore_mem>> -> memref<!tpu.dma_semaphore, #tpu.memory_space<semaphore_mem>>
      tpu.enqueue_dma source(%162 : memref<1x128xf32, #tpu.memory_space<any>>) target(%164 : memref<1x128xf32, #tpu.memory_space<vmem>>) target_semaphore(%166 : memref<!tpu.dma_semaphore, #tpu.memory_space<semaphore_mem>>)
      %c16_i32_85 = arith.constant 16 : i32
    } else {
    }
    %c1_i32_5 = arith.constant 1 : i32
    %13 = arith.addi %arg1, %c1_i32_5 : i32
    %c1_i32_6 = arith.constant 1 : i32
    %14 = arith.cmpi slt, %13, %c1_i32_6 : i32
    %15 = arith.extui %14 : i1 to i32
    %c0_i32_7 = arith.constant 0 : i32
    %16 = arith.cmpi ne, %15, %c0_i32_7 : i32
    scf.if %16 {
      %c1_i32_17 = arith.constant 1 : i32
      %36 = arith.muli %arg0, %c1_i32_17 : i32
      %37 = arith.addi %36, %arg1 : i32
      %c1_i32_18 = arith.constant 1 : i32
      %38 = arith.addi %37, %c1_i32_18 : i32
      %c1_i32_19 = arith.constant 1 : i32
      %39 = arith.subi %c1_i32_19, %9 : i32
      %c16_i32 = arith.constant 16 : i32
      %40 = arith.muli %38, %c16_i32 : i32
      %41 = tpu.assume_multiple %40, 8 : i32
      %c0_i32_20 = arith.constant 0 : i32
      %42 = arith.addi %41, %c0_i32_20 : i32
      %43 = arith.index_cast %42 : i32 to index
      %44 = memref.load %arg2[%43] : memref<16xi32, #tpu.memory_space<smem>>
      %c0_i32_21 = arith.constant 0 : i32
      %45 = tpu.memref_slice %arg3[%44, %c0_i32_21] : memref<100x128xf32, #tpu.memory_space<any>> -> memref<1x128xf32, #tpu.memory_space<any>>
      %c0_i32_22 = arith.constant 0 : i32
      %46 = tpu.memref_slice %arg5[%39, %c0_i32_20, %c0_i32_22] : memref<2x16x128xf32, #tpu.memory_space<vmem>> -> memref<1x1x128xf32, #tpu.memory_space<vmem>>
      %47 = tpu.memref_squeeze %46 : memref<1x1x128xf32, #tpu.memory_space<vmem>> -> memref<1x128xf32, #tpu.memory_space<vmem>>
      %48 = tpu.memref_slice %arg6[%39] : memref<2x!tpu.dma_semaphore, #tpu.memory_space<semaphore_mem>> -> memref<1x!tpu.dma_semaphore, #tpu.memory_space<semaphore_mem>>
      %49 = tpu.memref_squeeze %48 : memref<1x!tpu.dma_semaphore, #tpu.memory_space<semaphore_mem>> -> memref<!tpu.dma_semaphore, #tpu.memory_space<semaphore_mem>>
      tpu.enqueue_dma source(%45 : memref<1x128xf32, #tpu.memory_space<any>>) target(%47 : memref<1x128xf32, #tpu.memory_space<vmem>>) target_semaphore(%49 : memref<!tpu.dma_semaphore, #tpu.memory_space<semaphore_mem>>)
      %c1_i32_23 = arith.constant 1 : i32
      %50 = arith.addi %41, %c1_i32_23 : i32
      %51 = arith.index_cast %50 : i32 to index
      %52 = memref.load %arg2[%51] : memref<16xi32, #tpu.memory_space<smem>>
      %c0_i32_24 = arith.constant 0 : i32
      %53 = tpu.memref_slice %arg3[%52, %c0_i32_24] : memref<100x128xf32, #tpu.memory_space<any>> -> memref<1x128xf32, #tpu.memory_space<any>>
      %c0_i32_25 = arith.constant 0 : i32
      %54 = tpu.memref_slice %arg5[%39, %c1_i32_23, %c0_i32_25] : memref<2x16x128xf32, #tpu.memory_space<vmem>> -> memref<1x1x128xf32, #tpu.memory_space<vmem>>
      %55 = tpu.memref_squeeze %54 : memref<1x1x128xf32, #tpu.memory_space<vmem>> -> memref<1x128xf32, #tpu.memory_space<vmem>>
      %56 = tpu.memref_slice %arg6[%39] : memref<2x!tpu.dma_semaphore, #tpu.memory_space<semaphore_mem>> -> memref<1x!tpu.dma_semaphore, #tpu.memory_space<semaphore_mem>>
      %57 = tpu.memref_squeeze %56 : memref<1x!tpu.dma_semaphore, #tpu.memory_space<semaphore_mem>> -> memref<!tpu.dma_semaphore, #tpu.memory_space<semaphore_mem>>
      tpu.enqueue_dma source(%53 : memref<1x128xf32, #tpu.memory_space<any>>) target(%55 : memref<1x128xf32, #tpu.memory_space<vmem>>) target_semaphore(%57 : memref<!tpu.dma_semaphore, #tpu.memory_space<semaphore_mem>>)
      %c2_i32_26 = arith.constant 2 : i32
      %58 = arith.addi %41, %c2_i32_26 : i32
      %59 = arith.index_cast %58 : i32 to index
      %60 = memref.load %arg2[%59] : memref<16xi32, #tpu.memory_space<smem>>
      %c0_i32_27 = arith.constant 0 : i32
      %61 = tpu.memref_slice %arg3[%60, %c0_i32_27] : memref<100x128xf32, #tpu.memory_space<any>> -> memref<1x128xf32, #tpu.memory_space<any>>
      %c0_i32_28 = arith.constant 0 : i32
      %62 = tpu.memref_slice %arg5[%39, %c2_i32_26, %c0_i32_28] : memref<2x16x128xf32, #tpu.memory_space<vmem>> -> memref<1x1x128xf32, #tpu.memory_space<vmem>>
      %63 = tpu.memref_squeeze %62 : memref<1x1x128xf32, #tpu.memory_space<vmem>> -> memref<1x128xf32, #tpu.memory_space<vmem>>
      %64 = tpu.memref_slice %arg6[%39] : memref<2x!tpu.dma_semaphore, #tpu.memory_space<semaphore_mem>> -> memref<1x!tpu.dma_semaphore, #tpu.memory_space<semaphore_mem>>
      %65 = tpu.memref_squeeze %64 : memref<1x!tpu.dma_semaphore, #tpu.memory_space<semaphore_mem>> -> memref<!tpu.dma_semaphore, #tpu.memory_space<semaphore_mem>>
      tpu.enqueue_dma source(%61 : memref<1x128xf32, #tpu.memory_space<any>>) target(%63 : memref<1x128xf32, #tpu.memory_space<vmem>>) target_semaphore(%65 : memref<!tpu.dma_semaphore, #tpu.memory_space<semaphore_mem>>)
      %c3_i32 = arith.constant 3 : i32
      %66 = arith.addi %41, %c3_i32 : i32
      %67 = arith.index_cast %66 : i32 to index
      %68 = memref.load %arg2[%67] : memref<16xi32, #tpu.memory_space<smem>>
      %c0_i32_29 = arith.constant 0 : i32
      %69 = tpu.memref_slice %arg3[%68, %c0_i32_29] : memref<100x128xf32, #tpu.memory_space<any>> -> memref<1x128xf32, #tpu.memory_space<any>>
      %c0_i32_30 = arith.constant 0 : i32
      %70 = tpu.memref_slice %arg5[%39, %c3_i32, %c0_i32_30] : memref<2x16x128xf32, #tpu.memory_space<vmem>> -> memref<1x1x128xf32, #tpu.memory_space<vmem>>
      %71 = tpu.memref_squeeze %70 : memref<1x1x128xf32, #tpu.memory_space<vmem>> -> memref<1x128xf32, #tpu.memory_space<vmem>>
      %72 = tpu.memref_slice %arg6[%39] : memref<2x!tpu.dma_semaphore, #tpu.memory_space<semaphore_mem>> -> memref<1x!tpu.dma_semaphore, #tpu.memory_space<semaphore_mem>>
      %73 = tpu.memref_squeeze %72 : memref<1x!tpu.dma_semaphore, #tpu.memory_space<semaphore_mem>> -> memref<!tpu.dma_semaphore, #tpu.memory_space<semaphore_mem>>
      tpu.enqueue_dma source(%69 : memref<1x128xf32, #tpu.memory_space<any>>) target(%71 : memref<1x128xf32, #tpu.memory_space<vmem>>) target_semaphore(%73 : memref<!tpu.dma_semaphore, #tpu.memory_space<semaphore_mem>>)
      %c4_i32 = arith.constant 4 : i32
      %74 = arith.addi %41, %c4_i32 : i32
      %75 = arith.index_cast %74 : i32 to index
      %76 = memref.load %arg2[%75] : memref<16xi32, #tpu.memory_space<smem>>
      %c0_i32_31 = arith.constant 0 : i32
      %77 = tpu.memref_slice %arg3[%76, %c0_i32_31] : memref<100x128xf32, #tpu.memory_space<any>> -> memref<1x128xf32, #tpu.memory_space<any>>
      %c0_i32_32 = arith.constant 0 : i32
      %78 = tpu.memref_slice %arg5[%39, %c4_i32, %c0_i32_32] : memref<2x16x128xf32, #tpu.memory_space<vmem>> -> memref<1x1x128xf32, #tpu.memory_space<vmem>>
      %79 = tpu.memref_squeeze %78 : memref<1x1x128xf32, #tpu.memory_space<vmem>> -> memref<1x128xf32, #tpu.memory_space<vmem>>
      %80 = tpu.memref_slice %arg6[%39] : memref<2x!tpu.dma_semaphore, #tpu.memory_space<semaphore_mem>> -> memref<1x!tpu.dma_semaphore, #tpu.memory_space<semaphore_mem>>
      %81 = tpu.memref_squeeze %80 : memref<1x!tpu.dma_semaphore, #tpu.memory_space<semaphore_mem>> -> memref<!tpu.dma_semaphore, #tpu.memory_space<semaphore_mem>>
      tpu.enqueue_dma source(%77 : memref<1x128xf32, #tpu.memory_space<any>>) target(%79 : memref<1x128xf32, #tpu.memory_space<vmem>>) target_semaphore(%81 : memref<!tpu.dma_semaphore, #tpu.memory_space<semaphore_mem>>)
      %c5_i32 = arith.constant 5 : i32
      %82 = arith.addi %41, %c5_i32 : i32
      %83 = arith.index_cast %82 : i32 to index
      %84 = memref.load %arg2[%83] : memref<16xi32, #tpu.memory_space<smem>>
      %c0_i32_33 = arith.constant 0 : i32
      %85 = tpu.memref_slice %arg3[%84, %c0_i32_33] : memref<100x128xf32, #tpu.memory_space<any>> -> memref<1x128xf32, #tpu.memory_space<any>>
      %c0_i32_34 = arith.constant 0 : i32
      %86 = tpu.memref_slice %arg5[%39, %c5_i32, %c0_i32_34] : memref<2x16x128xf32, #tpu.memory_space<vmem>> -> memref<1x1x128xf32, #tpu.memory_space<vmem>>
      %87 = tpu.memref_squeeze %86 : memref<1x1x128xf32, #tpu.memory_space<vmem>> -> memref<1x128xf32, #tpu.memory_space<vmem>>
      %88 = tpu.memref_slice %arg6[%39] : memref<2x!tpu.dma_semaphore, #tpu.memory_space<semaphore_mem>> -> memref<1x!tpu.dma_semaphore, #tpu.memory_space<semaphore_mem>>
      %89 = tpu.memref_squeeze %88 : memref<1x!tpu.dma_semaphore, #tpu.memory_space<semaphore_mem>> -> memref<!tpu.dma_semaphore, #tpu.memory_space<semaphore_mem>>
      tpu.enqueue_dma source(%85 : memref<1x128xf32, #tpu.memory_space<any>>) target(%87 : memref<1x128xf32, #tpu.memory_space<vmem>>) target_semaphore(%89 : memref<!tpu.dma_semaphore, #tpu.memory_space<semaphore_mem>>)
      %c6_i32 = arith.constant 6 : i32
      %90 = arith.addi %41, %c6_i32 : i32
      %91 = arith.index_cast %90 : i32 to index
      %92 = memref.load %arg2[%91] : memref<16xi32, #tpu.memory_space<smem>>
      %c0_i32_35 = arith.constant 0 : i32
      %93 = tpu.memref_slice %arg3[%92, %c0_i32_35] : memref<100x128xf32, #tpu.memory_space<any>> -> memref<1x128xf32, #tpu.memory_space<any>>
      %c0_i32_36 = arith.constant 0 : i32
      %94 = tpu.memref_slice %arg5[%39, %c6_i32, %c0_i32_36] : memref<2x16x128xf32, #tpu.memory_space<vmem>> -> memref<1x1x128xf32, #tpu.memory_space<vmem>>
      %95 = tpu.memref_squeeze %94 : memref<1x1x128xf32, #tpu.memory_space<vmem>> -> memref<1x128xf32, #tpu.memory_space<vmem>>
      %96 = tpu.memref_slice %arg6[%39] : memref<2x!tpu.dma_semaphore, #tpu.memory_space<semaphore_mem>> -> memref<1x!tpu.dma_semaphore, #tpu.memory_space<semaphore_mem>>
      %97 = tpu.memref_squeeze %96 : memref<1x!tpu.dma_semaphore, #tpu.memory_space<semaphore_mem>> -> memref<!tpu.dma_semaphore, #tpu.memory_space<semaphore_mem>>
      tpu.enqueue_dma source(%93 : memref<1x128xf32, #tpu.memory_space<any>>) target(%95 : memref<1x128xf32, #tpu.memory_space<vmem>>) target_semaphore(%97 : memref<!tpu.dma_semaphore, #tpu.memory_space<semaphore_mem>>)
      %c7_i32 = arith.constant 7 : i32
      %98 = arith.addi %41, %c7_i32 : i32
      %99 = arith.index_cast %98 : i32 to index
      %100 = memref.load %arg2[%99] : memref<16xi32, #tpu.memory_space<smem>>
      %c0_i32_37 = arith.constant 0 : i32
      %101 = tpu.memref_slice %arg3[%100, %c0_i32_37] : memref<100x128xf32, #tpu.memory_space<any>> -> memref<1x128xf32, #tpu.memory_space<any>>
      %c0_i32_38 = arith.constant 0 : i32
      %102 = tpu.memref_slice %arg5[%39, %c7_i32, %c0_i32_38] : memref<2x16x128xf32, #tpu.memory_space<vmem>> -> memref<1x1x128xf32, #tpu.memory_space<vmem>>
      %103 = tpu.memref_squeeze %102 : memref<1x1x128xf32, #tpu.memory_space<vmem>> -> memref<1x128xf32, #tpu.memory_space<vmem>>
      %104 = tpu.memref_slice %arg6[%39] : memref<2x!tpu.dma_semaphore, #tpu.memory_space<semaphore_mem>> -> memref<1x!tpu.dma_semaphore, #tpu.memory_space<semaphore_mem>>
      %105 = tpu.memref_squeeze %104 : memref<1x!tpu.dma_semaphore, #tpu.memory_space<semaphore_mem>> -> memref<!tpu.dma_semaphore, #tpu.memory_space<semaphore_mem>>
      tpu.enqueue_dma source(%101 : memref<1x128xf32, #tpu.memory_space<any>>) target(%103 : memref<1x128xf32, #tpu.memory_space<vmem>>) target_semaphore(%105 : memref<!tpu.dma_semaphore, #tpu.memory_space<semaphore_mem>>)
      %c8_i32 = arith.constant 8 : i32
      %106 = arith.addi %41, %c8_i32 : i32
      %107 = arith.index_cast %106 : i32 to index
      %108 = memref.load %arg2[%107] : memref<16xi32, #tpu.memory_space<smem>>
      %c0_i32_39 = arith.constant 0 : i32
      %109 = tpu.memref_slice %arg3[%108, %c0_i32_39] : memref<100x128xf32, #tpu.memory_space<any>> -> memref<1x128xf32, #tpu.memory_space<any>>
      %c0_i32_40 = arith.constant 0 : i32
      %110 = tpu.memref_slice %arg5[%39, %c8_i32, %c0_i32_40] : memref<2x16x128xf32, #tpu.memory_space<vmem>> -> memref<1x1x128xf32, #tpu.memory_space<vmem>>
      %111 = tpu.memref_squeeze %110 : memref<1x1x128xf32, #tpu.memory_space<vmem>> -> memref<1x128xf32, #tpu.memory_space<vmem>>
      %112 = tpu.memref_slice %arg6[%39] : memref<2x!tpu.dma_semaphore, #tpu.memory_space<semaphore_mem>> -> memref<1x!tpu.dma_semaphore, #tpu.memory_space<semaphore_mem>>
      %113 = tpu.memref_squeeze %112 : memref<1x!tpu.dma_semaphore, #tpu.memory_space<semaphore_mem>> -> memref<!tpu.dma_semaphore, #tpu.memory_space<semaphore_mem>>
      tpu.enqueue_dma source(%109 : memref<1x128xf32, #tpu.memory_space<any>>) target(%111 : memref<1x128xf32, #tpu.memory_space<vmem>>) target_semaphore(%113 : memref<!tpu.dma_semaphore, #tpu.memory_space<semaphore_mem>>)
      %c9_i32 = arith.constant 9 : i32
      %114 = arith.addi %41, %c9_i32 : i32
      %115 = arith.index_cast %114 : i32 to index
      %116 = memref.load %arg2[%115] : memref<16xi32, #tpu.memory_space<smem>>
      %c0_i32_41 = arith.constant 0 : i32
      %117 = tpu.memref_slice %arg3[%116, %c0_i32_41] : memref<100x128xf32, #tpu.memory_space<any>> -> memref<1x128xf32, #tpu.memory_space<any>>
      %c0_i32_42 = arith.constant 0 : i32
      %118 = tpu.memref_slice %arg5[%39, %c9_i32, %c0_i32_42] : memref<2x16x128xf32, #tpu.memory_space<vmem>> -> memref<1x1x128xf32, #tpu.memory_space<vmem>>
      %119 = tpu.memref_squeeze %118 : memref<1x1x128xf32, #tpu.memory_space<vmem>> -> memref<1x128xf32, #tpu.memory_space<vmem>>
      %120 = tpu.memref_slice %arg6[%39] : memref<2x!tpu.dma_semaphore, #tpu.memory_space<semaphore_mem>> -> memref<1x!tpu.dma_semaphore, #tpu.memory_space<semaphore_mem>>
      %121 = tpu.memref_squeeze %120 : memref<1x!tpu.dma_semaphore, #tpu.memory_space<semaphore_mem>> -> memref<!tpu.dma_semaphore, #tpu.memory_space<semaphore_mem>>
      tpu.enqueue_dma source(%117 : memref<1x128xf32, #tpu.memory_space<any>>) target(%119 : memref<1x128xf32, #tpu.memory_space<vmem>>) target_semaphore(%121 : memref<!tpu.dma_semaphore, #tpu.memory_space<semaphore_mem>>)
      %c10_i32 = arith.constant 10 : i32
      %122 = arith.addi %41, %c10_i32 : i32
      %123 = arith.index_cast %122 : i32 to index
      %124 = memref.load %arg2[%123] : memref<16xi32, #tpu.memory_space<smem>>
      %c0_i32_43 = arith.constant 0 : i32
      %125 = tpu.memref_slice %arg3[%124, %c0_i32_43] : memref<100x128xf32, #tpu.memory_space<any>> -> memref<1x128xf32, #tpu.memory_space<any>>
      %c0_i32_44 = arith.constant 0 : i32
      %126 = tpu.memref_slice %arg5[%39, %c10_i32, %c0_i32_44] : memref<2x16x128xf32, #tpu.memory_space<vmem>> -> memref<1x1x128xf32, #tpu.memory_space<vmem>>
      %127 = tpu.memref_squeeze %126 : memref<1x1x128xf32, #tpu.memory_space<vmem>> -> memref<1x128xf32, #tpu.memory_space<vmem>>
      %128 = tpu.memref_slice %arg6[%39] : memref<2x!tpu.dma_semaphore, #tpu.memory_space<semaphore_mem>> -> memref<1x!tpu.dma_semaphore, #tpu.memory_space<semaphore_mem>>
      %129 = tpu.memref_squeeze %128 : memref<1x!tpu.dma_semaphore, #tpu.memory_space<semaphore_mem>> -> memref<!tpu.dma_semaphore, #tpu.memory_space<semaphore_mem>>
      tpu.enqueue_dma source(%125 : memref<1x128xf32, #tpu.memory_space<any>>) target(%127 : memref<1x128xf32, #tpu.memory_space<vmem>>) target_semaphore(%129 : memref<!tpu.dma_semaphore, #tpu.memory_space<semaphore_mem>>)
      %c11_i32 = arith.constant 11 : i32
      %130 = arith.addi %41, %c11_i32 : i32
      %131 = arith.index_cast %130 : i32 to index
      %132 = memref.load %arg2[%131] : memref<16xi32, #tpu.memory_space<smem>>
      %c0_i32_45 = arith.constant 0 : i32
      %133 = tpu.memref_slice %arg3[%132, %c0_i32_45] : memref<100x128xf32, #tpu.memory_space<any>> -> memref<1x128xf32, #tpu.memory_space<any>>
      %c0_i32_46 = arith.constant 0 : i32
      %134 = tpu.memref_slice %arg5[%39, %c11_i32, %c0_i32_46] : memref<2x16x128xf32, #tpu.memory_space<vmem>> -> memref<1x1x128xf32, #tpu.memory_space<vmem>>
      %135 = tpu.memref_squeeze %134 : memref<1x1x128xf32, #tpu.memory_space<vmem>> -> memref<1x128xf32, #tpu.memory_space<vmem>>
      %136 = tpu.memref_slice %arg6[%39] : memref<2x!tpu.dma_semaphore, #tpu.memory_space<semaphore_mem>> -> memref<1x!tpu.dma_semaphore, #tpu.memory_space<semaphore_mem>>
      %137 = tpu.memref_squeeze %136 : memref<1x!tpu.dma_semaphore, #tpu.memory_space<semaphore_mem>> -> memref<!tpu.dma_semaphore, #tpu.memory_space<semaphore_mem>>
      tpu.enqueue_dma source(%133 : memref<1x128xf32, #tpu.memory_space<any>>) target(%135 : memref<1x128xf32, #tpu.memory_space<vmem>>) target_semaphore(%137 : memref<!tpu.dma_semaphore, #tpu.memory_space<semaphore_mem>>)
      %c12_i32 = arith.constant 12 : i32
      %138 = arith.addi %41, %c12_i32 : i32
      %139 = arith.index_cast %138 : i32 to index
      %140 = memref.load %arg2[%139] : memref<16xi32, #tpu.memory_space<smem>>
      %c0_i32_47 = arith.constant 0 : i32
      %141 = tpu.memref_slice %arg3[%140, %c0_i32_47] : memref<100x128xf32, #tpu.memory_space<any>> -> memref<1x128xf32, #tpu.memory_space<any>>
      %c0_i32_48 = arith.constant 0 : i32
      %142 = tpu.memref_slice %arg5[%39, %c12_i32, %c0_i32_48] : memref<2x16x128xf32, #tpu.memory_space<vmem>> -> memref<1x1x128xf32, #tpu.memory_space<vmem>>
      %143 = tpu.memref_squeeze %142 : memref<1x1x128xf32, #tpu.memory_space<vmem>> -> memref<1x128xf32, #tpu.memory_space<vmem>>
      %144 = tpu.memref_slice %arg6[%39] : memref<2x!tpu.dma_semaphore, #tpu.memory_space<semaphore_mem>> -> memref<1x!tpu.dma_semaphore, #tpu.memory_space<semaphore_mem>>
      %145 = tpu.memref_squeeze %144 : memref<1x!tpu.dma_semaphore, #tpu.memory_space<semaphore_mem>> -> memref<!tpu.dma_semaphore, #tpu.memory_space<semaphore_mem>>
      tpu.enqueue_dma source(%141 : memref<1x128xf32, #tpu.memory_space<any>>) target(%143 : memref<1x128xf32, #tpu.memory_space<vmem>>) target_semaphore(%145 : memref<!tpu.dma_semaphore, #tpu.memory_space<semaphore_mem>>)
      %c13_i32 = arith.constant 13 : i32
      %146 = arith.addi %41, %c13_i32 : i32
      %147 = arith.index_cast %146 : i32 to index
      %148 = memref.load %arg2[%147] : memref<16xi32, #tpu.memory_space<smem>>
      %c0_i32_49 = arith.constant 0 : i32
      %149 = tpu.memref_slice %arg3[%148, %c0_i32_49] : memref<100x128xf32, #tpu.memory_space<any>> -> memref<1x128xf32, #tpu.memory_space<any>>
      %c0_i32_50 = arith.constant 0 : i32
      %150 = tpu.memref_slice %arg5[%39, %c13_i32, %c0_i32_50] : memref<2x16x128xf32, #tpu.memory_space<vmem>> -> memref<1x1x128xf32, #tpu.memory_space<vmem>>
      %151 = tpu.memref_squeeze %150 : memref<1x1x128xf32, #tpu.memory_space<vmem>> -> memref<1x128xf32, #tpu.memory_space<vmem>>
      %152 = tpu.memref_slice %arg6[%39] : memref<2x!tpu.dma_semaphore, #tpu.memory_space<semaphore_mem>> -> memref<1x!tpu.dma_semaphore, #tpu.memory_space<semaphore_mem>>
      %153 = tpu.memref_squeeze %152 : memref<1x!tpu.dma_semaphore, #tpu.memory_space<semaphore_mem>> -> memref<!tpu.dma_semaphore, #tpu.memory_space<semaphore_mem>>
      tpu.enqueue_dma source(%149 : memref<1x128xf32, #tpu.memory_space<any>>) target(%151 : memref<1x128xf32, #tpu.memory_space<vmem>>) target_semaphore(%153 : memref<!tpu.dma_semaphore, #tpu.memory_space<semaphore_mem>>)
      %c14_i32 = arith.constant 14 : i32
      %154 = arith.addi %41, %c14_i32 : i32
      %155 = arith.index_cast %154 : i32 to index
      %156 = memref.load %arg2[%155] : memref<16xi32, #tpu.memory_space<smem>>
      %c0_i32_51 = arith.constant 0 : i32
      %157 = tpu.memref_slice %arg3[%156, %c0_i32_51] : memref<100x128xf32, #tpu.memory_space<any>> -> memref<1x128xf32, #tpu.memory_space<any>>
      %c0_i32_52 = arith.constant 0 : i32
      %158 = tpu.memref_slice %arg5[%39, %c14_i32, %c0_i32_52] : memref<2x16x128xf32, #tpu.memory_space<vmem>> -> memref<1x1x128xf32, #tpu.memory_space<vmem>>
      %159 = tpu.memref_squeeze %158 : memref<1x1x128xf32, #tpu.memory_space<vmem>> -> memref<1x128xf32, #tpu.memory_space<vmem>>
      %160 = tpu.memref_slice %arg6[%39] : memref<2x!tpu.dma_semaphore, #tpu.memory_space<semaphore_mem>> -> memref<1x!tpu.dma_semaphore, #tpu.memory_space<semaphore_mem>>
      %161 = tpu.memref_squeeze %160 : memref<1x!tpu.dma_semaphore, #tpu.memory_space<semaphore_mem>> -> memref<!tpu.dma_semaphore, #tpu.memory_space<semaphore_mem>>
      tpu.enqueue_dma source(%157 : memref<1x128xf32, #tpu.memory_space<any>>) target(%159 : memref<1x128xf32, #tpu.memory_space<vmem>>) target_semaphore(%161 : memref<!tpu.dma_semaphore, #tpu.memory_space<semaphore_mem>>)
      %c15_i32 = arith.constant 15 : i32
      %162 = arith.addi %41, %c15_i32 : i32
      %163 = arith.index_cast %162 : i32 to index
      %164 = memref.load %arg2[%163] : memref<16xi32, #tpu.memory_space<smem>>
      %c0_i32_53 = arith.constant 0 : i32
      %165 = tpu.memref_slice %arg3[%164, %c0_i32_53] : memref<100x128xf32, #tpu.memory_space<any>> -> memref<1x128xf32, #tpu.memory_space<any>>
      %c0_i32_54 = arith.constant 0 : i32
      %166 = tpu.memref_slice %arg5[%39, %c15_i32, %c0_i32_54] : memref<2x16x128xf32, #tpu.memory_space<vmem>> -> memref<1x1x128xf32, #tpu.memory_space<vmem>>
      %167 = tpu.memref_squeeze %166 : memref<1x1x128xf32, #tpu.memory_space<vmem>> -> memref<1x128xf32, #tpu.memory_space<vmem>>
      %168 = tpu.memref_slice %arg6[%39] : memref<2x!tpu.dma_semaphore, #tpu.memory_space<semaphore_mem>> -> memref<1x!tpu.dma_semaphore, #tpu.memory_space<semaphore_mem>>
      %169 = tpu.memref_squeeze %168 : memref<1x!tpu.dma_semaphore, #tpu.memory_space<semaphore_mem>> -> memref<!tpu.dma_semaphore, #tpu.memory_space<semaphore_mem>>
      tpu.enqueue_dma source(%165 : memref<1x128xf32, #tpu.memory_space<any>>) target(%167 : memref<1x128xf32, #tpu.memory_space<vmem>>) target_semaphore(%169 : memref<!tpu.dma_semaphore, #tpu.memory_space<semaphore_mem>>)
      %c16_i32_55 = arith.constant 16 : i32
    } else {
    }
    %c1_i32_8 = arith.constant 1 : i32
    %17 = arith.subi %c1_i32_8, %9 : i32
    %c0_i32_9 = arith.constant 0 : i32
    %c0_i32_10 = arith.constant 0 : i32
    %18 = tpu.memref_slice %arg5[%17, %c0_i32_9, %c0_i32_10] : memref<2x16x128xf32, #tpu.memory_space<vmem>> -> memref<1x16x128xf32, #tpu.memory_space<vmem>>
    %19 = tpu.memref_squeeze %18 : memref<1x16x128xf32, #tpu.memory_space<vmem>> -> memref<16x128xf32, #tpu.memory_space<vmem>>
    %c0_i32_11 = arith.constant 0 : i32
    %c0_i32_12 = arith.constant 0 : i32
    %20 = tpu.memref_slice %arg5[%9, %c0_i32_11, %c0_i32_12] : memref<2x16x128xf32, #tpu.memory_space<vmem>> -> memref<1x16x128xf32, #tpu.memory_space<vmem>>
    %21 = tpu.memref_squeeze %20 : memref<1x16x128xf32, #tpu.memory_space<vmem>> -> memref<16x128xf32, #tpu.memory_space<vmem>>
    %22 = tpu.memref_slice %arg6[%9] : memref<2x!tpu.dma_semaphore, #tpu.memory_space<semaphore_mem>> -> memref<1x!tpu.dma_semaphore, #tpu.memory_space<semaphore_mem>>
    %23 = tpu.memref_squeeze %22 : memref<1x!tpu.dma_semaphore, #tpu.memory_space<semaphore_mem>> -> memref<!tpu.dma_semaphore, #tpu.memory_space<semaphore_mem>>
    tpu.wait_dma2 semaphore(%23 : memref<!tpu.dma_semaphore, #tpu.memory_space<semaphore_mem>>) src(%19 : memref<16x128xf32, #tpu.memory_space<vmem>>) dst(%21 : memref<16x128xf32, #tpu.memory_space<vmem>>)
    %24 = arith.index_cast %9 : i32 to index
    %c0 = arith.constant 0 : index
    %c0_13 = arith.constant 0 : index
    %25 = vector.load %arg5[%24, %c0, %c0_13] : memref<2x16x128xf32, #tpu.memory_space<vmem>>, vector<1x16x128xf32>
    %26 = vector.shape_cast %25 : vector<1x16x128xf32> to vector<16x128xf32>
    %27 = arith.mulf %26, %26 : vector<16x128xf32>
    %cst = arith.constant dense<0.000000e+00> : vector<16xf32>
    %28 = vector.multi_reduction <add>, %27, %cst [1] : vector<16x128xf32> to vector<16xf32>
    %29 = vector.shape_cast %28 : vector<16xf32> to vector<16x1xf32>
    %cst_14 = arith.constant 1.000000e-24 : f32
    %30 = vector.broadcast %cst_14 : f32 to vector<16x1xf32>
    %31 = arith.maximumf %29, %30 : vector<16x1xf32>
    %32 = math.rsqrt %31 : vector<16x1xf32>
    %33 = vector.broadcast %32 : vector<16x1xf32> to vector<16x128xf32>
    %34 = arith.mulf %26, %33 : vector<16x128xf32>
    %c0_15 = arith.constant 0 : index
    %c0_16 = arith.constant 0 : index
    %35 = vector.load %arg4[%c0_15, %c0_16] : memref<16x128xf32, #tpu.memory_space<vmem>>, vector<16x128xf32>
    tpu.vector_store %arg4[%c0_15, %c0_16], %34 {strides = array<i32>} : memref<16x128xf32, #tpu.memory_space<vmem>>, vector<16x128xf32>,
    return
  }
  func.func @transform_1(%arg0: i32, %arg1: i32, %arg2: memref<16xi32, #tpu.memory_space<smem>>) -> (i32, i32) {
    %c1_i32 = arith.constant 1 : i32
    %0 = arith.muli %arg0, %c1_i32 : i32
    %1 = arith.addi %0, %arg1 : i32
    %c0_i32 = arith.constant 0 : i32
    %c0_i32_0 = arith.constant 0 : i32
    return %1, %c0_i32 : i32, i32
  }
}

</mosaic_0001>

<llo_original>
// kernel: tpu_custom_call.1
$region0: #{tpu_custom_call.1}
  #allocation0 [shape = 'u32[]', space=smem, size = 0x4, offset = 0x4, fixed_abs, tag = 'smem constant byte address 0x4 - core index']
  #allocation1 [shape = 'u32[144,128]{1,0:T(1,128)}', space=vmem, size = 0x12000, scoped, tag = 'internal scratch']
  #allocation2 [shape = 'f32[2,16,128]{2,1,0:T(8,128)}', space=vmem, size = 0x4000, scoped, tag = 'scratch operand']
  #allocation3 [shape = 's32[2]{0}', space=sflag, size = 0x8, scoped, tag = 'scratch operand']
  #allocation4 [shape = 's32[1]{0}', space=sflag, size = 0x4, scoped, tag = 'scoped memory for tpu_custom_call.1']
  #allocation5 [shape = 'u8[512]{0}', space=smem, size = 0x200, scoped, tag = 'prefetched SMEM operand 0']
  #allocation8 [shape = 's32[]', space=sflag, size = 0x4, offset = 0, fixed_abs, tag = 'sflag constant byte address 0x0 - dummy sync flag']
  #allocation9 [shape = 's32[]', space=sflag, size = 0x4, offset = 0, fixed_abs, tag = 'sflag constant byte address 0x0 - dummy sync flag']
  #allocation10 [shape = 'u32[]', space=smem, size = 0x4, offset = 0x44, fixed_abs, tag = 'smem constant byte address 0x44 - assertion arg 0']
  #allocation11 [shape = 'u32[]', space=smem, size = 0x4, offset = 0x48, fixed_abs, tag = 'smem constant byte address 0x48 - assertion arg 1']
  #allocation12 [shape = 's32[]', space=sflag, size = 0x4, offset = 0, fixed_abs, tag = 'sflag constant byte address 0x0 - dummy sync flag']
  #allocation13 [shape = 's32[]', space=sflag, size = 0x4, offset = 0, fixed_abs, tag = 'sflag constant byte address 0x0 - dummy sync flag']
  #allocation14 [shape = 's32[]', space=sflag, size = 0x4, offset = 0, fixed_abs, tag = 'sflag constant byte address 0x0 - dummy sync flag']
  #allocation15 [shape = 's32[]', space=sflag, size = 0x4, offset = 0, fixed_abs, tag = 'sflag constant byte address 0x0 - dummy sync flag']
  #allocation16 [shape = 's32[]', space=sflag, size = 0x4, offset = 0, fixed_abs, tag = 'sflag constant byte address 0x0 - dummy sync flag']
  #allocation17 [shape = 's32[]', space=sflag, size = 0x4, offset = 0, fixed_abs, tag = 'sflag constant byte address 0x0 - dummy sync flag']
  #allocation18 [shape = 's32[]', space=sflag, size = 0x4, offset = 0, fixed_abs, tag = 'sflag constant byte address 0x0 - dummy sync flag']
  #allocation19 [shape = 's32[]', space=sflag, size = 0x4, offset = 0, fixed_abs, tag = 'sflag constant byte address 0x0 - dummy sync flag']
  #allocation20 [shape = 's32[]', space=sflag, size = 0x4, offset = 0, fixed_abs, tag = 'sflag constant byte address 0x0 - dummy sync flag']
  #allocation21 [shape = 's32[]', space=sflag, size = 0x4, offset = 0, fixed_abs, tag = 'sflag constant byte address 0x0 - dummy sync flag']
  #allocation22 [shape = 's32[]', space=sflag, size = 0x4, offset = 0, fixed_abs, tag = 'sflag constant byte address 0x0 - dummy sync flag']
  #allocation23 [shape = 's32[]', space=sflag, size = 0x4, offset = 0, fixed_abs, tag = 'sflag constant byte address 0x0 - dummy sync flag']
  #allocation24 [shape = 's32[]', space=sflag, size = 0x4, offset = 0, fixed_abs, tag = 'sflag constant byte address 0x0 - dummy sync flag']
  #allocation25 [shape = 's32[]', space=sflag, size = 0x4, offset = 0, fixed_abs, tag = 'sflag constant byte address 0x0 - dummy sync flag']
  #allocation26 [shape = 's32[]', space=sflag, size = 0x4, offset = 0, fixed_abs, tag = 'sflag constant byte address 0x0 - dummy sync flag']
  #allocation27 [shape = 's32[]', space=sflag, size = 0x4, offset = 0, fixed_abs, tag = 'sflag constant byte address 0x0 - dummy sync flag']
  #allocation28 [shape = 's32[]', space=sflag, size = 0x4, offset = 0, fixed_abs, tag = 'sflag constant byte address 0x0 - dummy sync flag']
  #allocation29 [shape = 's32[]', space=sflag, size = 0x4, offset = 0, fixed_abs, tag = 'sflag constant byte address 0x0 - dummy sync flag']
  #allocation30 [shape = 's32[]', space=sflag, size = 0x4, offset = 0, fixed_abs, tag = 'sflag constant byte address 0x0 - dummy sync flag']
  #allocation31 [shape = 's32[]', space=sflag, size = 0x4, offset = 0, fixed_abs, tag = 'sflag constant byte address 0x0 - dummy sync flag']
  #allocation32 [shape = 's32[]', space=sflag, size = 0x4, offset = 0, fixed_abs, tag = 'sflag constant byte address 0x0 - dummy sync flag']
  #allocation33 [shape = 's32[]', space=sflag, size = 0x4, offset = 0, fixed_abs, tag = 'sflag constant byte address 0x0 - dummy sync flag']
  #allocation34 [shape = 's32[]', space=sflag, size = 0x4, offset = 0, fixed_abs, tag = 'sflag constant byte address 0x0 - dummy sync flag']
  #allocation35 [shape = 's32[]', space=sflag, size = 0x4, offset = 0, fixed_abs, tag = 'sflag constant byte address 0x0 - dummy sync flag']
  #allocation36 [shape = 's32[]', space=sflag, size = 0x4, offset = 0, fixed_abs, tag = 'sflag constant byte address 0x0 - dummy sync flag']
  #allocation37 [shape = 's32[]', space=sflag, size = 0x4, offset = 0, fixed_abs, tag = 'sflag constant byte address 0x0 - dummy sync flag']
  #allocation38 [shape = 's32[]', space=sflag, size = 0x4, offset = 0, fixed_abs, tag = 'sflag constant byte address 0x0 - dummy sync flag']
  #allocation39 [shape = 's32[]', space=sflag, size = 0x4, offset = 0, fixed_abs, tag = 'sflag constant byte address 0x0 - dummy sync flag']
  #allocation40 [shape = 's32[]', space=sflag, size = 0x4, offset = 0, fixed_abs, tag = 'sflag constant byte address 0x0 - dummy sync flag']
  #allocation41 [shape = 's32[]', space=sflag, size = 0x4, offset = 0, fixed_abs, tag = 'sflag constant byte address 0x0 - dummy sync flag']
  #allocation42 [shape = 's32[]', space=sflag, size = 0x4, offset = 0, fixed_abs, tag = 'sflag constant byte address 0x0 - dummy sync flag']
  #allocation43 [shape = 's32[]', space=sflag, size = 0x4, offset = 0, fixed_abs, tag = 'sflag constant byte address 0x0 - dummy sync flag']
  #allocation44 [shape = 's32[]', space=sflag, size = 0x4, offset = 0, fixed_abs, tag = 'sflag constant byte address 0x0 - dummy sync flag']
  #allocation45 [shape = 's32[]', space=sflag, size = 0x4, offset = 0, fixed_abs, tag = 'sflag constant byte address 0x0 - dummy sync flag']
  #allocation46 [shape = 's32[]', space=sflag, size = 0x4, offset = 0, fixed_abs, tag = 'sflag constant byte address 0x0 - dummy sync flag']
  #allocation47 [shape = 's32[]', space=sflag, size = 0x4, offset = 0, fixed_abs, tag = 'sflag constant byte address 0x0 - dummy sync flag']
  #allocation48 [shape = 's32[]', space=sflag, size = 0x4, offset = 0, fixed_abs, tag = 'sflag constant byte address 0x0 - dummy sync flag']
  #allocation49 [shape = 's32[]', space=sflag, size = 0x4, offset = 0, fixed_abs, tag = 'sflag constant byte address 0x0 - dummy sync flag']
  #allocation50 [shape = 's32[]', space=sflag, size = 0x4, offset = 0, fixed_abs, tag = 'sflag constant byte address 0x0 - dummy sync flag']
  #allocation51 [shape = 's32[]', space=sflag, size = 0x4, offset = 0, fixed_abs, tag = 'sflag constant byte address 0x0 - dummy sync flag']
  #allocation52 [shape = 's32[]', space=sflag, size = 0x4, offset = 0, fixed_abs, tag = 'sflag constant byte address 0x0 - dummy sync flag']
  #allocation53 [shape = 's32[]', space=sflag, size = 0x4, offset = 0, fixed_abs, tag = 'sflag constant byte address 0x0 - dummy sync flag']
  #allocation54 [shape = 's32[]', space=sflag, size = 0x4, offset = 0, fixed_abs, tag = 'sflag constant byte address 0x0 - dummy sync flag']
  #allocation55 [shape = 's32[]', space=sflag, size = 0x4, offset = 0, fixed_abs, tag = 'sflag constant byte address 0x0 - dummy sync flag']
  #allocation56 [shape = 's32[]', space=sflag, size = 0x4, offset = 0, fixed_abs, tag = 'sflag constant byte address 0x0 - dummy sync flag']
  #allocation57 [shape = 's32[]', space=sflag, size = 0x4, offset = 0, fixed_abs, tag = 'sflag constant byte address 0x0 - dummy sync flag']
  #allocation58 [shape = 's32[]', space=sflag, size = 0x4, offset = 0, fixed_abs, tag = 'sflag constant byte address 0x0 - dummy sync flag']
  #allocation59 [shape = 's32[]', space=sflag, size = 0x4, offset = 0, fixed_abs, tag = 'sflag constant byte address 0x0 - dummy sync flag']
  #allocation60 [shape = 's32[]', space=sflag, size = 0x4, offset = 0, fixed_abs, tag = 'sflag constant byte address 0x0 - dummy sync flag']
  #allocation61 [shape = 's32[]', space=sflag, size = 0x4, offset = 0, fixed_abs, tag = 'sflag constant byte address 0x0 - dummy sync flag']
  #allocation62 [shape = 's32[]', space=sflag, size = 0x4, offset = 0, fixed_abs, tag = 'sflag constant byte address 0x0 - dummy sync flag']
  #allocation63 [shape = 's32[]', space=sflag, size = 0x4, offset = 0, fixed_abs, tag = 'sflag constant byte address 0x0 - dummy sync flag']
  #allocation64 [shape = 's32[]', space=sflag, size = 0x4, offset = 0, fixed_abs, tag = 'sflag constant byte address 0x0 - dummy sync flag']
  #allocation65 [shape = 's32[]', space=sflag, size = 0x4, offset = 0, fixed_abs, tag = 'sflag constant byte address 0x0 - dummy sync flag']
  #allocation66 [shape = 's32[]', space=sflag, size = 0x4, offset = 0, fixed_abs, tag = 'sflag constant byte address 0x0 - dummy sync flag']
  #allocation67 [shape = 's32[]', space=sflag, size = 0x4, offset = 0, fixed_abs, tag = 'sflag constant byte address 0x0 - dummy sync flag']
  #allocation68 [shape = 's32[]', space=sflag, size = 0x4, offset = 0, fixed_abs, tag = 'sflag constant byte address 0x0 - dummy sync flag']
  #allocation69 [shape = 's32[]', space=sflag, size = 0x4, offset = 0, fixed_abs, tag = 'sflag constant byte address 0x0 - dummy sync flag']
  #allocation70 [shape = 's32[]', space=sflag, size = 0x4, offset = 0, fixed_abs, tag = 'sflag constant byte address 0x0 - dummy sync flag']
  #allocation71 [shape = 's32[]', space=sflag, size = 0x4, offset = 0, fixed_abs, tag = 'sflag constant byte address 0x0 - dummy sync flag']
  #allocation72 [shape = 's32[]', space=sflag, size = 0x4, offset = 0, fixed_abs, tag = 'sflag constant byte address 0x0 - dummy sync flag']
  #allocation73 [shape = 's32[]', space=sflag, size = 0x4, offset = 0, fixed_abs, tag = 'sflag constant byte address 0x0 - dummy sync flag']
  %s0 = inlined_call_operand.hbm [shape: s32[16], index: 0, kind: input, shape index: {}]
  %s1 = inlined_call_operand.hbm [shape: f32[100,128], index: 1, kind: input, shape index: {}]
  %s2 = inlined_call_operand.hbm [shape: f32[16,128], index: 2, kind: output, shape index: {}]
  %s3 = sld [smem:[#allocation0]]
  $region146: #{tpu_custom_call.1} parent=0
    _
  %s5 = ssub.s32 1, %s3
  %s6 = scalar_select 0, %s5, %s3
  %8 = dma.hbm_to_smem %s0, 16, [#allocation5], [#allocation4]
  %9 = dma.done [#allocation4], 16
  %10 = sfence
  $region1: #{tpu_custom_call.1} parent=0
    #allocation6 [shape = 'u8[8192]{0}', space=vmem, size = 0x2000, scoped, tag = 'output window, operand 0, single buffered']
    #allocation7 [shape = 's32[1]{0}', space=sflag, size = 0x4, scoped, tag = 'scoped memory for tpu_custom_call.1']
    %11 = vsyncpa [#allocation7], 0
    %s12 = sadd.s32 0, 0
    %s13 = smul.u32 2, %s12
    %s14 = ssub.s32 0, 0
    %s15 = ssub.s32 0, 0
    %p16 = scmp.ne.s32.totalorder 0, 0
    %p17 = scmp.lt.s32.totalorder 0, 0
    %p18 = pnand %p17, %p16
    %p19 = pneg %p18
    %s20 = sadd.s32 0, 2
    %s21 = scalar_select %p19, %s20, 0
    %p22 = scmp.eq.s32.totalorder 0, 0
    // Predicated region
    $region2: #{tpu_custom_call.1} parent=1 // pred_check
      %p23 = pneg %p22
    $region3: #{tpu_custom_call.1} parent=1 // pred_check_branch
      %25 = sbr.rel (%p23) target = $region5
    $region4: #{tpu_custom_call.1} parent=1 // pred_region
      %s26 = smul.u32 0, 16
      %s27 = sld [smem:[#allocation5 + %s26]]
      %s28 = smul.addr %s27, 16
      %s29 = scalar_lea.hbm %s1, %s28
      // Predicated region
      $region6: #{tpu_custom_call.1} parent=4 // pred_check
        _
      $region7: #{tpu_custom_call.1} parent=4 // pred_check_branch
        %31 = sbr.rel target = $region9
      $region8: #{tpu_custom_call.1} parent=4 // pred_region
        %32 = sst [smem:[#allocation10]] [#allocation9]
        %33 = sst [smem:[#allocation11]] [#allocation8]
      $region9: #{tpu_custom_call.1} parent=4 // pred_fallthru
        _
      %35 = shalt.err (0)
      %s37 = sshll.u32 [#allocation2], 4
      %s38 = int_to_ptr.vmem [resolvable:$true] %s37
      %40 = dma.hbm_to_vmem [thread:$0]  %s29, 16, %s38, [#allocation3]
      %s41 = sadd.s32 %s26, 1
      %s42 = sld [smem:[#allocation5 + %s41]]
      %s43 = smul.addr %s42, 16
      %s44 = scalar_lea.hbm %s1, %s43
      %s45 = scalar_lea.vmem [#allocation2], 1
      // Predicated region
      $region10: #{tpu_custom_call.1} parent=4 // pred_check
        _
      $region11: #{tpu_custom_call.1} parent=4 // pred_check_branch
        %47 = sbr.rel target = $region13
      $region12: #{tpu_custom_call.1} parent=4 // pred_region
        %48 = sst [smem:[#allocation10]] [#allocation13]
        %49 = sst [smem:[#allocation11]] [#allocation12]
      $region13: #{tpu_custom_call.1} parent=4 // pred_fallthru
        _
      %51 = shalt.err (0)
      %s53 = sshll.u32 %s45, 4
      %s54 = int_to_ptr.vmem [resolvable:$true] %s53
      %56 = dma.hbm_to_vmem [thread:$0]  %s44, 16, %s54, [#allocation3]
      %s57 = sadd.s32 %s26, 2
      %s58 = sld [smem:[#allocation5 + %s57]]
      %s59 = smul.addr %s58, 16
      %s60 = scalar_lea.hbm %s1, %s59
      %s61 = scalar_lea.vmem [#allocation2], 2
      // Predicated region
      $region14: #{tpu_custom_call.1} parent=4 // pred_check
        _
      $region15: #{tpu_custom_call.1} parent=4 // pred_check_branch
        %63 = sbr.rel target = $region17
      $region16: #{tpu_custom_call.1} parent=4 // pred_region
        %64 = sst [smem:[#allocation10]] [#allocation15]
        %65 = sst [smem:[#allocation11]] [#allocation14]
      $region17: #{tpu_custom_call.1} parent=4 // pred_fallthru
        _
      %67 = shalt.err (0)
      %s69 = sshll.u32 %s61, 4
      %s70 = int_to_ptr.vmem [resolvable:$true] %s69
      %72 = dma.hbm_to_vmem [thread:$0]  %s60, 16, %s70, [#allocation3]
      %s73 = sadd.s32 %s26, 3
      %s74 = sld [smem:[#allocation5 + %s73]]
      %s75 = smul.addr %s74, 16
      %s76 = scalar_lea.hbm %s1, %s75
      %s77 = scalar_lea.vmem [#allocation2], 3
      // Predicated region
      $region18: #{tpu_custom_call.1} parent=4 // pred_check
        _
      $region19: #{tpu_custom_call.1} parent=4 // pred_check_branch
        %79 = sbr.rel target = $region21
      $region20: #{tpu_custom_call.1} parent=4 // pred_region
        %80 = sst [smem:[#allocation10]] [#allocation17]
        %81 = sst [smem:[#allocation11]] [#allocation16]
      $region21: #{tpu_custom_call.1} parent=4 // pred_fallthru
        _
      %83 = shalt.err (0)
      %s85 = sshll.u32 %s77, 4
      %s86 = int_to_ptr.vmem [resolvable:$true] %s85
      %88 = dma.hbm_to_vmem [thread:$0]  %s76, 16, %s86, [#allocation3]
      %s89 = sadd.s32 %s26, 4
      %s90 = sld [smem:[#allocation5 + %s89]]
      %s91 = smul.addr %s90, 16
      %s92 = scalar_lea.hbm %s1, %s91
      %s93 = scalar_lea.vmem [#allocation2], 4
      // Predicated region
      $region22: #{tpu_custom_call.1} parent=4 // pred_check
        _
      $region23: #{tpu_custom_call.1} parent=4 // pred_check_branch
        %95 = sbr.rel target = $region25
      $region24: #{tpu_custom_call.1} parent=4 // pred_region
        %96 = sst [smem:[#allocation10]] [#allocation19]
        %97 = sst [smem:[#allocation11]] [#allocation18]
      $region25: #{tpu_custom_call.1} parent=4 // pred_fallthru
        _
      %99 = shalt.err (0)
      %s101 = sshll.u32 %s93, 4
      %s102 = int_to_ptr.vmem [resolvable:$true] %s101
      %104 = dma.hbm_to_vmem [thread:$0]  %s92, 16, %s102, [#allocation3]
      %s105 = sadd.s32 %s26, 5
      %s106 = sld [smem:[#allocation5 + %s105]]
      %s107 = smul.addr %s106, 16
      %s108 = scalar_lea.hbm %s1, %s107
      %s109 = scalar_lea.vmem [#allocation2], 5
      // Predicated region
      $region26: #{tpu_custom_call.1} parent=4 // pred_check
        _
      $region27: #{tpu_custom_call.1} parent=4 // pred_check_branch
        %111 = sbr.rel target = $region29
      $region28: #{tpu_custom_call.1} parent=4 // pred_region
        %112 = sst [smem:[#allocation10]] [#allocation21]
        %113 = sst [smem:[#allocation11]] [#allocation20]
      $region29: #{tpu_custom_call.1} parent=4 // pred_fallthru
        _
      %115 = shalt.err (0)
      %s117 = sshll.u32 %s109, 4
      %s118 = int_to_ptr.vmem [resolvable:$true] %s117
      %120 = dma.hbm_to_vmem [thread:$0]  %s108, 16, %s118, [#allocation3]
      %s121 = sadd.s32 %s26, 6
      %s122 = sld [smem:[#allocation5 + %s121]]
      %s123 = smul.addr %s122, 16
      %s124 = scalar_lea.hbm %s1, %s123
      %s125 = scalar_lea.vmem [#allocation2], 6
      // Predicated region
      $region30: #{tpu_custom_call.1} parent=4 // pred_check
        _
      $region31: #{tpu_custom_call.1} parent=4 // pred_check_branch
        %127 = sbr.rel target = $region33
      $region32: #{tpu_custom_call.1} parent=4 // pred_region
        %128 = sst [smem:[#allocation10]] [#allocation23]
        %129 = sst [smem:[#allocation11]] [#allocation22]
      $region33: #{tpu_custom_call.1} parent=4 // pred_fallthru
        _
      %131 = shalt.err (0)
      %s133 = sshll.u32 %s125, 4
      %s134 = int_to_ptr.vmem [resolvable:$true] %s133
      %136 = dma.hbm_to_vmem [thread:$0]  %s124, 16, %s134, [#allocation3]
      %s137 = sadd.s32 %s26, 7
      %s138 = sld [smem:[#allocation5 + %s137]]
      %s139 = smul.addr %s138, 16
      %s140 = scalar_lea.hbm %s1, %s139
      %s141 = scalar_lea.vmem [#allocation2], 7
      // Predicated region
      $region34: #{tpu_custom_call.1} parent=4 // pred_check
        _
      $region35: #{tpu_custom_call.1} parent=4 // pred_check_branch
        %143 = sbr.rel target = $region37
      $region36: #{tpu_custom_call.1} parent=4 // pred_region
        %144 = sst [smem:[#allocation10]] [#allocation25]
        %145 = sst [smem:[#allocation11]] [#allocation24]
      $region37: #{tpu_custom_call.1} parent=4 // pred_fallthru
        _
      %147 = shalt.err (0)
      %s149 = sshll.u32 %s141, 4
      %s150 = int_to_ptr.vmem [resolvable:$true] %s149
      %152 = dma.hbm_to_vmem [thread:$0]  %s140, 16, %s150, [#allocation3]
      %s153 = sadd.s32 %s26, 8
      %s154 = sld [smem:[#allocation5 + %s153]]
      %s155 = smul.addr %s154, 16
      %s156 = scalar_lea.hbm %s1, %s155
      %s157 = scalar_lea.vmem [#allocation2], 8
      // Predicated region
      $region38: #{tpu_custom_call.1} parent=4 // pred_check
        _
      $region39: #{tpu_custom_call.1} parent=4 // pred_check_branch
        %159 = sbr.rel target = $region41
      $region40: #{tpu_custom_call.1} parent=4 // pred_region
        %160 = sst [smem:[#allocation10]] [#allocation27]
        %161 = sst [smem:[#allocation11]] [#allocation26]
      $region41: #{tpu_custom_call.1} parent=4 // pred_fallthru
        _
      %163 = shalt.err (0)
      %s165 = sshll.u32 %s157, 4
      %s166 = int_to_ptr.vmem [resolvable:$true] %s165
      %168 = dma.hbm_to_vmem [thread:$0]  %s156, 16, %s166, [#allocation3]
      %s169 = sadd.s32 %s26, 9
      %s170 = sld [smem:[#allocation5 + %s169]]
      %s171 = smul.addr %s170, 16
      %s172 = scalar_lea.hbm %s1, %s171
      %s173 = scalar_lea.vmem [#allocation2], 9
      // Predicated region
      $region42: #{tpu_custom_call.1} parent=4 // pred_check
        _
      $region43: #{tpu_custom_call.1} parent=4 // pred_check_branch
        %175 = sbr.rel target = $region45
      $region44: #{tpu_custom_call.1} parent=4 // pred_region
        %176 = sst [smem:[#allocation10]] [#allocation29]
        %177 = sst [smem:[#allocation11]] [#allocation28]
      $region45: #{tpu_custom_call.1} parent=4 // pred_fallthru
        _
      %179 = shalt.err (0)
      %s181 = sshll.u32 %s173, 4
      %s182 = int_to_ptr.vmem [resolvable:$true] %s181
      %184 = dma.hbm_to_vmem [thread:$0]  %s172, 16, %s182, [#allocation3]
      %s185 = sadd.s32 %s26, 10
      %s186 = sld [smem:[#allocation5 + %s185]]
      %s187 = smul.addr %s186, 16
      %s188 = scalar_lea.hbm %s1, %s187
      %s189 = scalar_lea.vmem [#allocation2], 10
      // Predicated region
      $region46: #{tpu_custom_call.1} parent=4 // pred_check
        _
      $region47: #{tpu_custom_call.1} parent=4 // pred_check_branch
        %191 = sbr.rel target = $region49
      $region48: #{tpu_custom_call.1} parent=4 // pred_region
        %192 = sst [smem:[#allocation10]] [#allocation31]
        %193 = sst [smem:[#allocation11]] [#allocation30]
      $region49: #{tpu_custom_call.1} parent=4 // pred_fallthru
        _
      %195 = shalt.err (0)
      %s197 = sshll.u32 %s189, 4
      %s198 = int_to_ptr.vmem [resolvable:$true] %s197
      %200 = dma.hbm_to_vmem [thread:$0]  %s188, 16, %s198, [#allocation3]
      %s201 = sadd.s32 %s26, 11
      %s202 = sld [smem:[#allocation5 + %s201]]
      %s203 = smul.addr %s202, 16
      %s204 = scalar_lea.hbm %s1, %s203
      %s205 = scalar_lea.vmem [#allocation2], 11
      // Predicated region
      $region50: #{tpu_custom_call.1} parent=4 // pred_check
        _
      $region51: #{tpu_custom_call.1} parent=4 // pred_check_branch
        %207 = sbr.rel target = $region53
      $region52: #{tpu_custom_call.1} parent=4 // pred_region
        %208 = sst [smem:[#allocation10]] [#allocation33]
        %209 = sst [smem:[#allocation11]] [#allocation32]
      $region53: #{tpu_custom_call.1} parent=4 // pred_fallthru
        _
      %211 = shalt.err (0)
      %s213 = sshll.u32 %s205, 4
      %s214 = int_to_ptr.vmem [resolvable:$true] %s213
      %216 = dma.hbm_to_vmem [thread:$0]  %s204, 16, %s214, [#allocation3]
      %s217 = sadd.s32 %s26, 12
      %s218 = sld [smem:[#allocation5 + %s217]]
      %s219 = smul.addr %s218, 16
      %s220 = scalar_lea.hbm %s1, %s219
      %s221 = scalar_lea.vmem [#allocation2], 12
      // Predicated region
      $region54: #{tpu_custom_call.1} parent=4 // pred_check
        _
      $region55: #{tpu_custom_call.1} parent=4 // pred_check_branch
        %223 = sbr.rel target = $region57
      $region56: #{tpu_custom_call.1} parent=4 // pred_region
        %224 = sst [smem:[#allocation10]] [#allocation35]
        %225 = sst [smem:[#allocation11]] [#allocation34]
      $region57: #{tpu_custom_call.1} parent=4 // pred_fallthru
        _
      %227 = shalt.err (0)
      %s229 = sshll.u32 %s221, 4
      %s230 = int_to_ptr.vmem [resolvable:$true] %s229
      %232 = dma.hbm_to_vmem [thread:$0]  %s220, 16, %s230, [#allocation3]
      %s233 = sadd.s32 %s26, 13
      %s234 = sld [smem:[#allocation5 + %s233]]
      %s235 = smul.addr %s234, 16
      %s236 = scalar_lea.hbm %s1, %s235
      %s237 = scalar_lea.vmem [#allocation2], 13
      // Predicated region
      $region58: #{tpu_custom_call.1} parent=4 // pred_check
        _
      $region59: #{tpu_custom_call.1} parent=4 // pred_check_branch
        %239 = sbr.rel target = $region61
      $region60: #{tpu_custom_call.1} parent=4 // pred_region
        %240 = sst [smem:[#allocation10]] [#allocation37]
        %241 = sst [smem:[#allocation11]] [#allocation36]
      $region61: #{tpu_custom_call.1} parent=4 // pred_fallthru
        _
      %243 = shalt.err (0)
      %s245 = sshll.u32 %s237, 4
      %s246 = int_to_ptr.vmem [resolvable:$true] %s245
      %248 = dma.hbm_to_vmem [thread:$0]  %s236, 16, %s246, [#allocation3]
      %s249 = sadd.s32 %s26, 14
      %s250 = sld [smem:[#allocation5 + %s249]]
      %s251 = smul.addr %s250, 16
      %s252 = scalar_lea.hbm %s1, %s251
      %s253 = scalar_lea.vmem [#allocation2], 14
      // Predicated region
      $region62: #{tpu_custom_call.1} parent=4 // pred_check
        _
      $region63: #{tpu_custom_call.1} parent=4 // pred_check_branch
        %255 = sbr.rel target = $region65
      $region64: #{tpu_custom_call.1} parent=4 // pred_region
        %256 = sst [smem:[#allocation10]] [#allocation39]
        %257 = sst [smem:[#allocation11]] [#allocation38]
      $region65: #{tpu_custom_call.1} parent=4 // pred_fallthru
        _
      %259 = shalt.err (0)
      %s261 = sshll.u32 %s253, 4
      %s262 = int_to_ptr.vmem [resolvable:$true] %s261
      %264 = dma.hbm_to_vmem [thread:$0]  %s252, 16, %s262, [#allocation3]
      %s265 = sadd.s32 %s26, 15
      %s266 = sld [smem:[#allocation5 + %s265]]
      %s267 = smul.addr %s266, 16
      %s268 = scalar_lea.hbm %s1, %s267
      %s269 = scalar_lea.vmem [#allocation2], 15
      // Predicated region
      $region66: #{tpu_custom_call.1} parent=4 // pred_check
        _
      $region67: #{tpu_custom_call.1} parent=4 // pred_check_branch
        %271 = sbr.rel target = $region69
      $region68: #{tpu_custom_call.1} parent=4 // pred_region
        %272 = sst [smem:[#allocation10]] [#allocation41]
        %273 = sst [smem:[#allocation11]] [#allocation40]
      $region69: #{tpu_custom_call.1} parent=4 // pred_fallthru
        _
      %275 = shalt.err (0)
      %s277 = sshll.u32 %s269, 4
      %s278 = int_to_ptr.vmem [resolvable:$true] %s277
      %280 = dma.hbm_to_vmem [thread:$0]  %s268, 16, %s278, [#allocation3]
    $region5: #{tpu_custom_call.1} parent=1 // pred_fallthru
      _
    %s281 = sadd.s32 0, 1
    %p282 = scmp.lt.s32.totalorder %s281, 1
    // Predicated region
    $region70: #{tpu_custom_call.1} parent=1 // pred_check
      %p283 = pneg %p282
    $region71: #{tpu_custom_call.1} parent=1 // pred_check_branch
      %285 = sbr.rel (%p283) target = $region73
    $region72: #{tpu_custom_call.1} parent=1 // pred_region
      %s286 = sadd.s32 0, 0
      %s287 = sadd.s32 %s286, 1
      %s288 = ssub.s32 1, %s21
      %s289 = smul.u32 %s287, 16
      %s290 = sld [smem:[#allocation5 + %s289]]
      %s291 = smul.addr %s290, 16
      %s292 = scalar_lea.hbm %s1, %s291
      %s293 = smul.u32 %s288, 16
      %s294 = scalar_lea.vmem [#allocation2], %s293
      %s295 = scalar_lea.sflag [#allocation3], %s288
      // Predicated region
      $region74: #{tpu_custom_call.1} parent=72 // pred_check
        _
      $region75: #{tpu_custom_call.1} parent=72 // pred_check_branch
        %297 = sbr.rel target = $region77
      $region76: #{tpu_custom_call.1} parent=72 // pred_region
        %298 = sst [smem:[#allocation10]] [#allocation43]
        %299 = sst [smem:[#allocation11]] [#allocation42]
      $region77: #{tpu_custom_call.1} parent=72 // pred_fallthru
        _
      %301 = shalt.err (0)
      %s303 = sshll.u32 %s294, 4
      %s304 = int_to_ptr.vmem [resolvable:$true] %s303
      %306 = dma.hbm_to_vmem [thread:$0]  %s292, 16, %s304, %s295
      %s307 = sadd.s32 %s289, 1
      %s308 = sld [smem:[#allocation5 + %s307]]
      %s309 = smul.addr %s308, 16
      %s310 = scalar_lea.hbm %s1, %s309
      %s311 = sadd.s32 1, %s293
      %s312 = scalar_lea.vmem [#allocation2], %s311
      // Predicated region
      $region78: #{tpu_custom_call.1} parent=72 // pred_check
        _
      $region79: #{tpu_custom_call.1} parent=72 // pred_check_branch
        %314 = sbr.rel target = $region81
      $region80: #{tpu_custom_call.1} parent=72 // pred_region
        %315 = sst [smem:[#allocation10]] [#allocation45]
        %316 = sst [smem:[#allocation11]] [#allocation44]
      $region81: #{tpu_custom_call.1} parent=72 // pred_fallthru
        _
      %318 = shalt.err (0)
      %s320 = sshll.u32 %s312, 4
      %s321 = int_to_ptr.vmem [resolvable:$true] %s320
      %323 = dma.hbm_to_vmem [thread:$0]  %s310, 16, %s321, %s295
      %s324 = sadd.s32 %s289, 2
      %s325 = sld [smem:[#allocation5 + %s324]]
      %s326 = smul.addr %s325, 16
      %s327 = scalar_lea.hbm %s1, %s326
      %s328 = sadd.s32 2, %s293
      %s329 = scalar_lea.vmem [#allocation2], %s328
      // Predicated region
      $region82: #{tpu_custom_call.1} parent=72 // pred_check
        _
      $region83: #{tpu_custom_call.1} parent=72 // pred_check_branch
        %331 = sbr.rel target = $region85
      $region84: #{tpu_custom_call.1} parent=72 // pred_region
        %332 = sst [smem:[#allocation10]] [#allocation47]
        %333 = sst [smem:[#allocation11]] [#allocation46]
      $region85: #{tpu_custom_call.1} parent=72 // pred_fallthru
        _
      %335 = shalt.err (0)
      %s337 = sshll.u32 %s329, 4
      %s338 = int_to_ptr.vmem [resolvable:$true] %s337
      %340 = dma.hbm_to_vmem [thread:$0]  %s327, 16, %s338, %s295
      %s341 = sadd.s32 %s289, 3
      %s342 = sld [smem:[#allocation5 + %s341]]
      %s343 = smul.addr %s342, 16
      %s344 = scalar_lea.hbm %s1, %s343
      %s345 = sadd.s32 3, %s293
      %s346 = scalar_lea.vmem [#allocation2], %s345
      // Predicated region
      $region86: #{tpu_custom_call.1} parent=72 // pred_check
        _
      $region87: #{tpu_custom_call.1} parent=72 // pred_check_branch
        %348 = sbr.rel target = $region89
      $region88: #{tpu_custom_call.1} parent=72 // pred_region
        %349 = sst [smem:[#allocation10]] [#allocation49]
        %350 = sst [smem:[#allocation11]] [#allocation48]
      $region89: #{tpu_custom_call.1} parent=72 // pred_fallthru
        _
      %352 = shalt.err (0)
      %s354 = sshll.u32 %s346, 4
      %s355 = int_to_ptr.vmem [resolvable:$true] %s354
      %357 = dma.hbm_to_vmem [thread:$0]  %s344, 16, %s355, %s295
      %s358 = sadd.s32 %s289, 4
      %s359 = sld [smem:[#allocation5 + %s358]]
      %s360 = smul.addr %s359, 16
      %s361 = scalar_lea.hbm %s1, %s360
      %s362 = sadd.s32 4, %s293
      %s363 = scalar_lea.vmem [#allocation2], %s362
      // Predicated region
      $region90: #{tpu_custom_call.1} parent=72 // pred_check
        _
      $region91: #{tpu_custom_call.1} parent=72 // pred_check_branch
        %365 = sbr.rel target = $region93
      $region92: #{tpu_custom_call.1} parent=72 // pred_region
        %366 = sst [smem:[#allocation10]] [#allocation51]
        %367 = sst [smem:[#allocation11]] [#allocation50]
      $region93: #{tpu_custom_call.1} parent=72 // pred_fallthru
        _
      %369 = shalt.err (0)
      %s371 = sshll.u32 %s363, 4
      %s372 = int_to_ptr.vmem [resolvable:$true] %s371
      %374 = dma.hbm_to_vmem [thread:$0]  %s361, 16, %s372, %s295
      %s375 = sadd.s32 %s289, 5
      %s376 = sld [smem:[#allocation5 + %s375]]
      %s377 = smul.addr %s376, 16
      %s378 = scalar_lea.hbm %s1, %s377
      %s379 = sadd.s32 5, %s293
      %s380 = scalar_lea.vmem [#allocation2], %s379
      // Predicated region
      $region94: #{tpu_custom_call.1} parent=72 // pred_check
        _
      $region95: #{tpu_custom_call.1} parent=72 // pred_check_branch
        %382 = sbr.rel target = $region97
      $region96: #{tpu_custom_call.1} parent=72 // pred_region
        %383 = sst [smem:[#allocation10]] [#allocation53]
        %384 = sst [smem:[#allocation11]] [#allocation52]
      $region97: #{tpu_custom_call.1} parent=72 // pred_fallthru
        _
      %386 = shalt.err (0)
      %s388 = sshll.u32 %s380, 4
      %s389 = int_to_ptr.vmem [resolvable:$true] %s388
      %391 = dma.hbm_to_vmem [thread:$0]  %s378, 16, %s389, %s295
      %s392 = sadd.s32 %s289, 6
      %s393 = sld [smem:[#allocation5 + %s392]]
      %s394 = smul.addr %s393, 16
      %s395 = scalar_lea.hbm %s1, %s394
      %s396 = sadd.s32 6, %s293
      %s397 = scalar_lea.vmem [#allocation2], %s396
      // Predicated region
      $region98: #{tpu_custom_call.1} parent=72 // pred_check
        _
      $region99: #{tpu_custom_call.1} parent=72 // pred_check_branch
        %399 = sbr.rel target = $region101
      $region100: #{tpu_custom_call.1} parent=72 // pred_region
        %400 = sst [smem:[#allocation10]] [#allocation55]
        %401 = sst [smem:[#allocation11]] [#allocation54]
      $region101: #{tpu_custom_call.1} parent=72 // pred_fallthru
        _
      %403 = shalt.err (0)
      %s405 = sshll.u32 %s397, 4
      %s406 = int_to_ptr.vmem [resolvable:$true] %s405
      %408 = dma.hbm_to_vmem [thread:$0]  %s395, 16, %s406, %s295
      %s409 = sadd.s32 %s289, 7
      %s410 = sld [smem:[#allocation5 + %s409]]
      %s411 = smul.addr %s410, 16
      %s412 = scalar_lea.hbm %s1, %s411
      %s413 = sadd.s32 7, %s293
      %s414 = scalar_lea.vmem [#allocation2], %s413
      // Predicated region
      $region102: #{tpu_custom_call.1} parent=72 // pred_check
        _
      $region103: #{tpu_custom_call.1} parent=72 // pred_check_branch
        %416 = sbr.rel target = $region105
      $region104: #{tpu_custom_call.1} parent=72 // pred_region
        %417 = sst [smem:[#allocation10]] [#allocation57]
        %418 = sst [smem:[#allocation11]] [#allocation56]
      $region105: #{tpu_custom_call.1} parent=72 // pred_fallthru
        _
      %420 = shalt.err (0)
      %s422 = sshll.u32 %s414, 4
      %s423 = int_to_ptr.vmem [resolvable:$true] %s422
      %425 = dma.hbm_to_vmem [thread:$0]  %s412, 16, %s423, %s295
      %s426 = sadd.s32 %s289, 8
      %s427 = sld [smem:[#allocation5 + %s426]]
      %s428 = smul.addr %s427, 16
      %s429 = scalar_lea.hbm %s1, %s428
      %s430 = sadd.s32 8, %s293
      %s431 = scalar_lea.vmem [#allocation2], %s430
      // Predicated region
      $region106: #{tpu_custom_call.1} parent=72 // pred_check
        _
      $region107: #{tpu_custom_call.1} parent=72 // pred_check_branch
        %433 = sbr.rel target = $region109
      $region108: #{tpu_custom_call.1} parent=72 // pred_region
        %434 = sst [smem:[#allocation10]] [#allocation59]
        %435 = sst [smem:[#allocation11]] [#allocation58]
      $region109: #{tpu_custom_call.1} parent=72 // pred_fallthru
        _
      %437 = shalt.err (0)
      %s439 = sshll.u32 %s431, 4
      %s440 = int_to_ptr.vmem [resolvable:$true] %s439
      %442 = dma.hbm_to_vmem [thread:$0]  %s429, 16, %s440, %s295
      %s443 = sadd.s32 %s289, 9
      %s444 = sld [smem:[#allocation5 + %s443]]
      %s445 = smul.addr %s444, 16
      %s446 = scalar_lea.hbm %s1, %s445
      %s447 = sadd.s32 9, %s293
      %s448 = scalar_lea.vmem [#allocation2], %s447
      // Predicated region
      $region110: #{tpu_custom_call.1} parent=72 // pred_check
        _
      $region111: #{tpu_custom_call.1} parent=72 // pred_check_branch
        %450 = sbr.rel target = $region113
      $region112: #{tpu_custom_call.1} parent=72 // pred_region
        %451 = sst [smem:[#allocation10]] [#allocation61]
        %452 = sst [smem:[#allocation11]] [#allocation60]
      $region113: #{tpu_custom_call.1} parent=72 // pred_fallthru
        _
      %454 = shalt.err (0)
      %s456 = sshll.u32 %s448, 4
      %s457 = int_to_ptr.vmem [resolvable:$true] %s456
      %459 = dma.hbm_to_vmem [thread:$0]  %s446, 16, %s457, %s295
      %s460 = sadd.s32 %s289, 10
      %s461 = sld [smem:[#allocation5 + %s460]]
      %s462 = smul.addr %s461, 16
      %s463 = scalar_lea.hbm %s1, %s462
      %s464 = sadd.s32 10, %s293
      %s465 = scalar_lea.vmem [#allocation2], %s464
      // Predicated region
      $region114: #{tpu_custom_call.1} parent=72 // pred_check
        _
      $region115: #{tpu_custom_call.1} parent=72 // pred_check_branch
        %467 = sbr.rel target = $region117
      $region116: #{tpu_custom_call.1} parent=72 // pred_region
        %468 = sst [smem:[#allocation10]] [#allocation63]
        %469 = sst [smem:[#allocation11]] [#allocation62]
      $region117: #{tpu_custom_call.1} parent=72 // pred_fallthru
        _
      %471 = shalt.err (0)
      %s473 = sshll.u32 %s465, 4
      %s474 = int_to_ptr.vmem [resolvable:$true] %s473
      %476 = dma.hbm_to_vmem [thread:$0]  %s463, 16, %s474, %s295
      %s477 = sadd.s32 %s289, 11
      %s478 = sld [smem:[#allocation5 + %s477]]
      %s479 = smul.addr %s478, 16
      %s480 = scalar_lea.hbm %s1, %s479
      %s481 = sadd.s32 11, %s293
      %s482 = scalar_lea.vmem [#allocation2], %s481
      // Predicated region
      $region118: #{tpu_custom_call.1} parent=72 // pred_check
        _
      $region119: #{tpu_custom_call.1} parent=72 // pred_check_branch
        %484 = sbr.rel target = $region121
      $region120: #{tpu_custom_call.1} parent=72 // pred_region
        %485 = sst [smem:[#allocation10]] [#allocation65]
        %486 = sst [smem:[#allocation11]] [#allocation64]
      $region121: #{tpu_custom_call.1} parent=72 // pred_fallthru
        _
      %488 = shalt.err (0)
      %s490 = sshll.u32 %s482, 4
      %s491 = int_to_ptr.vmem [resolvable:$true] %s490
      %493 = dma.hbm_to_vmem [thread:$0]  %s480, 16, %s491, %s295
      %s494 = sadd.s32 %s289, 12
      %s495 = sld [smem:[#allocation5 + %s494]]
      %s496 = smul.addr %s495, 16
      %s497 = scalar_lea.hbm %s1, %s496
      %s498 = sadd.s32 12, %s293
      %s499 = scalar_lea.vmem [#allocation2], %s498
      // Predicated region
      $region122: #{tpu_custom_call.1} parent=72 // pred_check
        _
      $region123: #{tpu_custom_call.1} parent=72 // pred_check_branch
        %501 = sbr.rel target = $region125
      $region124: #{tpu_custom_call.1} parent=72 // pred_region
        %502 = sst [smem:[#allocation10]] [#allocation67]
        %503 = sst [smem:[#allocation11]] [#allocation66]
      $region125: #{tpu_custom_call.1} parent=72 // pred_fallthru
        _
      %505 = shalt.err (0)
      %s507 = sshll.u32 %s499, 4
      %s508 = int_to_ptr.vmem [resolvable:$true] %s507
      %510 = dma.hbm_to_vmem [thread:$0]  %s497, 16, %s508, %s295
      %s511 = sadd.s32 %s289, 13
      %s512 = sld [smem:[#allocation5 + %s511]]
      %s513 = smul.addr %s512, 16
      %s514 = scalar_lea.hbm %s1, %s513
      %s515 = sadd.s32 13, %s293
      %s516 = scalar_lea.vmem [#allocation2], %s515
      // Predicated region
      $region126: #{tpu_custom_call.1} parent=72 // pred_check
        _
      $region127: #{tpu_custom_call.1} parent=72 // pred_check_branch
        %518 = sbr.rel target = $region129
      $region128: #{tpu_custom_call.1} parent=72 // pred_region
        %519 = sst [smem:[#allocation10]] [#allocation69]
        %520 = sst [smem:[#allocation11]] [#allocation68]
      $region129: #{tpu_custom_call.1} parent=72 // pred_fallthru
        _
      %522 = shalt.err (0)
      %s524 = sshll.u32 %s516, 4
      %s525 = int_to_ptr.vmem [resolvable:$true] %s524
      %527 = dma.hbm_to_vmem [thread:$0]  %s514, 16, %s525, %s295
      %s528 = sadd.s32 %s289, 14
      %s529 = sld [smem:[#allocation5 + %s528]]
      %s530 = smul.addr %s529, 16
      %s531 = scalar_lea.hbm %s1, %s530
      %s532 = sadd.s32 14, %s293
      %s533 = scalar_lea.vmem [#allocation2], %s532
      // Predicated region
      $region130: #{tpu_custom_call.1} parent=72 // pred_check
        _
      $region131: #{tpu_custom_call.1} parent=72 // pred_check_branch
        %535 = sbr.rel target = $region133
      $region132: #{tpu_custom_call.1} parent=72 // pred_region
        %536 = sst [smem:[#allocation10]] [#allocation71]
        %537 = sst [smem:[#allocation11]] [#allocation70]
      $region133: #{tpu_custom_call.1} parent=72 // pred_fallthru
        _
      %539 = shalt.err (0)
      %s541 = sshll.u32 %s533, 4
      %s542 = int_to_ptr.vmem [resolvable:$true] %s541
      %544 = dma.hbm_to_vmem [thread:$0]  %s531, 16, %s542, %s295
      %s545 = sadd.s32 %s289, 15
      %s546 = sld [smem:[#allocation5 + %s545]]
      %s547 = smul.addr %s546, 16
      %s548 = scalar_lea.hbm %s1, %s547
      %s549 = sadd.s32 15, %s293
      %s550 = scalar_lea.vmem [#allocation2], %s549
      // Predicated region
      $region134: #{tpu_custom_call.1} parent=72 // pred_check
        _
      $region135: #{tpu_custom_call.1} parent=72 // pred_check_branch
        %552 = sbr.rel target = $region137
      $region136: #{tpu_custom_call.1} parent=72 // pred_region
        %553 = sst [smem:[#allocation10]] [#allocation73]
        %554 = sst [smem:[#allocation11]] [#allocation72]
      $region137: #{tpu_custom_call.1} parent=72 // pred_fallthru
        _
      %556 = shalt.err (0)
      %s558 = sshll.u32 %s550, 4
      %s559 = int_to_ptr.vmem [resolvable:$true] %s558
      %561 = dma.hbm_to_vmem [thread:$0]  %s548, 16, %s559, %s295
    $region73: #{tpu_custom_call.1} parent=1 // pred_fallthru
      _
    %s562 = smul.u32 %s21, 16
    %s563 = scalar_lea.vmem [#allocation2], %s562
    %s564 = scalar_lea.sflag [#allocation3], %s21
    %s565 = smul.u32 16, 1
    %s566 = sshll.u32 %s565, 4
    %567 = dma.done %s564, %s566
    %v568 = vld [vmem:[%s563] sm:$0xff]
    %v569 = vld [vmem:[%s563 + $0x8] sm:$0xff]
    %v570 = vmul.f32 %v568, %v568
    %v571 = vmul.f32 %v569, %v569
    %572 = vadd.xlane.f32.xlu0 %v570
    %v573 = vpop.xlane.xlu0 %572
    %574 = vadd.xlane.f32.xlu0 %v571
    %v575 = vpop.xlane.xlu0 %574
    %v576 = vmax.f32 %v573, 1e-24
    %v577 = vmax.f32 %v575, 1e-24
    %v578 = vrsqrt.pop %v576
    %v579 = vrsqrt.pop %v577
    %v580 = vmul.f32 %v568, %v578
    %v581 = vmul.f32 %v569, %v579
    %582 = vst [vmem:[#allocation6] sm:$0xff] %v580
    %583 = vst [vmem:[#allocation6 + $0x8] sm:$0xff] %v581
    // Predicated region
    $region138: #{tpu_custom_call.1} parent=1 // pred_check
      _
    $region139: #{tpu_custom_call.1} parent=1 // pred_check_branch
      %585 = sbr.rel (0) target = $region141
    $region140: #{tpu_custom_call.1} parent=1 // pred_region
      %s586 = sadd.s32 0, 0
      %s587 = smul.u32 2, %s586
      %s589 = ssub.s32 256, 256
      %590 = vsyncadd [#allocation7], %s589
      %s591 = smul.addr %s587, 128
      %s592 = scalar_lea.hbm %s2, %s591
      %s593 = sshll.u32 [#allocation6], 4
      %s594 = int_to_ptr.vmem [resolvable:$true] %s593
      %599 = dma.vmem_to_hbm [thread:$0]  %s594, 256, %s592, [#allocation7], 128, 128, 8
    $region141: #{tpu_custom_call.1} parent=1 // pred_fallthru
      _
    // Predicated region
    $region142: #{tpu_custom_call.1} parent=1 // pred_check
      _
    $region143: #{tpu_custom_call.1} parent=1 // pred_check_branch
      %601 = sbr.rel (0) target = $region145
    $region144: #{tpu_custom_call.1} parent=1 // pred_region
      %602 = dma.done [#allocation7], 256
    $region145: #{tpu_custom_call.1} parent=1 // pred_fallthru
      _
    %603 = vsyncpa [#allocation7], 1
  %604 = vsyncmov [#allocation3]
  %s605 = vpop.sfrf %604
  %p606 = scmp.eq.s32.totalorder %s605, 0
  %p607 = pneg %p606
  %609 = shalt.err (%p607)
  %s610 = scalar_lea.sflag [#allocation3], 1
  %611 = vsyncmov %s610
  %s612 = vpop.sfrf %611
  %p613 = scmp.eq.s32.totalorder %s612, 0
  %p614 = pneg %p613
  %616 = shalt.err (%p614)

</llo_original>
